<compile_context>
chip_gen: v7x
topology: tpu7x:2x2x1
jax: 0.10.0
libtpu: 0.0.40
codegen_flags: <defaults>
</compile_context>

<pallas_src>
import functools
import math

import jax
import jax.numpy as jnp
from jax.experimental import pallas as pl
from jax.experimental.pallas import tpu as pltpu

# ---------------- Model hyperparameters (module defaults) -------------------
INPUT_SIZE = 32     # feature size of Q/K/V
D_K = 16
D_V = 16
N_HEADS = 8
BATCH = 2
SEQ = 8

_SCALE = 1.0 / (math.sqrt(D_K) + 1e-6)   # 1 / (d_k**0.5 + eps)
_HDK = N_HEADS * D_K                      # 128
_HDV = N_HEADS * D_V                      # 128


# ------------------------------ Pallas kernel -------------------------------
def transformer_block_kernel(qkv_ref, wqkv_ref, slab_ref, bias_ref, out_ref,
                             *, seq_len):
    n_tok = qkv_ref.shape[1]          # B * L
    d_model = qkv_ref.shape[2]        # input_size

    qf = qkv_ref[0]                   # (N, D)
    kf = qkv_ref[1]
    vf = qkv_ref[2]

    # --- Lane-dense QKV projections: (N, D) @ (D, H*dk) -> (N, 128) ----------
    # W_q is pre-scaled by 1/sqrt(d_k) at init.
    qp = jnp.dot(qf, wqkv_ref[:, :_HDK], preferred_element_type=jnp.float32)
    kp = jnp.dot(kf, wqkv_ref[:, _HDK:2 * _HDK],
                 preferred_element_type=jnp.float32)
    vp = jnp.dot(vf, wqkv_ref[:, 2 * _HDK:],
                 preferred_element_type=jnp.float32)

    # --- Head split: one 2-D transpose + major-dim reshape -------------------
    # (N, H*dk) -> (H*dk, N) -> (H, dk, N); only Q needs the (N, dk) orientation.
    qh = jnp.swapaxes(qp.T.reshape(N_HEADS, D_K, n_tok), 1, 2)   # (H, N, dk)
    khT = kp.T.reshape(N_HEADS, D_K, n_tok)                      # (H, dk, N)
    vhT = vp.T.reshape(N_HEADS, D_V, n_tok)                      # (H, dv, N)

    # --- Batched scaled-dot-product attention over all heads at once ---------
    scores = jnp.einsum('hqd,hdk->hqk', qh, khT,
                        preferred_element_type=jnp.float32)      # (H, N, N)

    # In-kernel additive block mask: a token attends only within its own batch
    # element. Every row keeps >=1 unmasked entry, so the softmax denom is > 0.
    n_batch = n_tok // seq_len
    if n_batch > 1:
        r = jax.lax.broadcasted_iota(jnp.int32, (n_tok, n_tok), 0)
        c = jax.lax.broadcasted_iota(jnp.int32, (n_tok, n_tok), 1)
        if n_batch == 2:
            same = (r >= seq_len) == (c >= seq_len)
        else:
            same = (r // seq_len) == (c // seq_len)
        scores = scores + jnp.where(same, 0.0, -1e30)

    m = jnp.max(scores, axis=-1, keepdims=True)
    e = jnp.exp(scores - m)
    p = e * pl.reciprocal(jnp.sum(e, axis=-1, keepdims=True), approx=False)
    # dropout on attention probs -> identity (eval mode)

    att = jnp.einsum('hqk,hdk->hqd', p, vhT,
                     preferred_element_type=jnp.float32)         # (H, N, dv)

    # --- Output projection folded per head, accumulated over heads -----------
    wo3 = slab_ref[0:_HDV, :].reshape(N_HEADS, D_V, d_model)     # (H, dv, D)
    v_att = jnp.sum(
        jnp.einsum('hnd,hdo->hno', att, wo3,
                   preferred_element_type=jnp.float32), axis=0)  # (N, D)
    # dropout on attention output -> identity (eval mode)

    # --- Residual + FFN -------------------------------------------------------
    x = qf + v_att
    w1t = slab_ref[_HDV:_HDV + d_model, :]                       # (D, D)
    w2t = slab_ref[_HDV + d_model:_HDV + 2 * d_model, :]         # (D, D)
    b1 = bias_ref[0:1, :]                                        # (1, D)
    b2 = bias_ref[1:2, :]
    h1 = jnp.maximum(
        jnp.dot(x, w1t, preferred_element_type=jnp.float32) + b1, 0.0)
    ffn = jnp.dot(h1, w2t, preferred_element_type=jnp.float32) + b2
    # dropout on FFN output -> identity (eval mode)

    out_ref[...] = (ffn + x).astype(out_ref.dtype)


# ----------------------- Init-time parameter packing ------------------------
def pack_params(params):
    """One-time layout plumbing (hoisted out of the per-call path)."""
    wq, wk, wv, wo, w1, b1, w2, b2 = params
    wqkv = jnp.concatenate([wq * _SCALE, wk, wv], axis=1)        # (D, 384)
    slab = jnp.concatenate([wo, w1.T, w2.T], axis=0)             # (192, D)
    bias = jnp.stack([b1, b2], axis=0)                           # (2, D)
    return wqkv, slab, bias


# --------------------------------- Wrapper ----------------------------------
@jax.jit
def transformer_block(Q, K, V, wqkv, slab, bias):
    B, L, D = Q.shape
    n_tok = B * L
    qkv = jnp.stack([Q, K, V], axis=0).reshape(3, n_tok, D)

    vmem = pl.BlockSpec(memory_space=pltpu.MemorySpace.VMEM)
    out_flat = pl.pallas_call(
        functools.partial(transformer_block_kernel, seq_len=L),
        out_shape=jax.ShapeDtypeStruct((n_tok, D), Q.dtype),
        in_specs=[vmem, vmem, vmem, vmem],
        out_specs=vmem,
    )(qkv, wqkv, slab, bias)
    return out_flat.reshape(B, L, D)


# ------------------------- Deterministic parameter init ---------------------
def xavier_normal(key, shape):
    fan_in, fan_out = shape[0], shape[1]
    std = math.sqrt(2.0 / (fan_in + fan_out))
    return std * jax.random.normal(key, shape, dtype=jnp.float32)


def init_params(key):
    ks = jax.random.split(key, 8)
    wq = xavier_normal(ks[0], (INPUT_SIZE, N_HEADS * D_K))
    wk = xavier_normal(ks[1], (INPUT_SIZE, N_HEADS * D_K))
    wv = xavier_normal(ks[2], (INPUT_SIZE, N_HEADS * D_V))
    wo = xavier_normal(ks[3], (N_HEADS * D_V, INPUT_SIZE))
    w1 = xavier_normal(ks[4], (INPUT_SIZE, INPUT_SIZE))   # linear1.weight (out,in)
    w2 = xavier_normal(ks[5], (INPUT_SIZE, INPUT_SIZE))   # linear2.weight (out,in)
    bound = 1.0 / math.sqrt(INPUT_SIZE)
    b1 = jax.random.uniform(ks[6], (INPUT_SIZE,), jnp.float32, -bound, bound)
    b2 = jax.random.uniform(ks[7], (INPUT_SIZE,), jnp.float32, -bound, bound)
    return (wq, wk, wv, wo, w1, b1, w2, b2)


# ------------------------------ Pure-JAX reference ---------------------------
def reference(Q, K, V, params):
    wq, wk, wv, wo, w1, b1, w2, b2 = params
    B, L, D = Q.shape
    qp = (Q @ wq).reshape(B, L, N_HEADS, D_K).transpose(0, 2, 1, 3)
    kp = (K @ wk).reshape(B, L, N_HEADS, D_K).transpose(0, 2, 1, 3)
    vp = (V @ wv).reshape(B, L, N_HEADS, D_V).transpose(0, 2, 1, 3)
    scores = jnp.einsum('bhqd,bhkd->bhqk', qp, kp) * _SCALE
    p = jax.nn.softmax(scores, axis=-1)
    att = jnp.einsum('bhqk,bhkd->bhqd', p, vp)
    att = att.transpose(0, 2, 1, 3).reshape(B, L, N_HEADS * D_V)
    x = Q + att @ wo
    ffn = jnp.maximum(x @ w1.T + b1, 0.0) @ w2.T + b2
    return ffn + x


# ----------------------------------- Main ------------------------------------
if __name__ == "__main__":
    key = jax.random.PRNGKey(0)
    k_params, k_q, k_k, k_v = jax.random.split(key, 4)

    params = init_params(k_params)
    wqkv, slab, bias = pack_params(params)           # init-time packing (hoisted)

    Q = jax.random.normal(k_q, (BATCH, SEQ, INPUT_SIZE), dtype=jnp.float32)
    K = jax.random.normal(k_k, (BATCH, SEQ, INPUT_SIZE), dtype=jnp.float32)
    V = jax.random.normal(k_v, (BATCH, SEQ, INPUT_SIZE), dtype=jnp.float32)

    out = transformer_block(Q, K, V, wqkv, slab, bias)
    out = jax.block_until_ready(out)

    ref = reference(Q, K, V, params)
    assert out.shape == (BATCH, SEQ, INPUT_SIZE)
    max_err = float(jnp.max(jnp.abs(out - ref)))
    assert jnp.allclose(out, ref, atol=1e-3, rtol=1e-3), f"max abs err {max_err}"

    print("KERNEL_OK")
</pallas_src>

<mosaic_0001>
module attributes {stable_mosaic.version = 11 : i64} {
  func.func @transformer_block_kernel(%arg0: memref<3x16x32xf32, #tpu.memory_space<vmem>>, %arg1: memref<32x384xf32, #tpu.memory_space<vmem>>, %arg2: memref<192x32xf32, #tpu.memory_space<vmem>>, %arg3: memref<2x32xf32, #tpu.memory_space<vmem>>, %arg4: memref<16x32xf32, #tpu.memory_space<vmem>>) attributes {dimension_semantics = [], scalar_prefetch = 0 : i64, scratch_operands = 0 : i64, tpu.core_type = #tpu.core_type<tc>} {
    %c0 = arith.constant 0 : index
    %c0_0 = arith.constant 0 : index
    %c0_1 = arith.constant 0 : index
    %0 = vector.load %arg0[%c0, %c0_0, %c0_1] : memref<3x16x32xf32, #tpu.memory_space<vmem>>, vector<1x16x32xf32>
    %1 = vector.shape_cast %0 : vector<1x16x32xf32> to vector<16x32xf32>
    %c1 = arith.constant 1 : index
    %c0_2 = arith.constant 0 : index
    %c0_3 = arith.constant 0 : index
    %2 = vector.load %arg0[%c1, %c0_2, %c0_3] : memref<3x16x32xf32, #tpu.memory_space<vmem>>, vector<1x16x32xf32>
    %3 = vector.shape_cast %2 : vector<1x16x32xf32> to vector<16x32xf32>
    %c2 = arith.constant 2 : index
    %c0_4 = arith.constant 0 : index
    %c0_5 = arith.constant 0 : index
    %4 = vector.load %arg0[%c2, %c0_4, %c0_5] : memref<3x16x32xf32, #tpu.memory_space<vmem>>, vector<1x16x32xf32>
    %5 = vector.shape_cast %4 : vector<1x16x32xf32> to vector<16x32xf32>
    %c0_6 = arith.constant 0 : index
    %c0_7 = arith.constant 0 : index
    %6 = vector.load %arg1[%c0_6, %c0_7] : memref<32x384xf32, #tpu.memory_space<vmem>>, vector<32x128xf32>
    %cst = arith.constant dense<0.000000e+00> : vector<16x128xf32>
    %7 = tpu.matmul %1, %6, %cst {dimension_numbers = #tpu.dot_dimension_numbers<[1], [0], [0], [1], [0, 0, 1, 1], [], []>} : vector<16x32xf32>, vector<32x128xf32>, vector<16x128xf32> -> vector<16x128xf32>
    %c0_8 = arith.constant 0 : index
    %c128 = arith.constant 128 : index
    %8 = vector.load %arg1[%c0_8, %c128] : memref<32x384xf32, #tpu.memory_space<vmem>>, vector<32x128xf32>
    %cst_9 = arith.constant dense<0.000000e+00> : vector<16x128xf32>
    %9 = tpu.matmul %3, %8, %cst_9 {dimension_numbers = #tpu.dot_dimension_numbers<[1], [0], [0], [1], [0, 0, 1, 1], [], []>} : vector<16x32xf32>, vector<32x128xf32>, vector<16x128xf32> -> vector<16x128xf32>
    %c0_10 = arith.constant 0 : index
    %c256 = arith.constant 256 : index
    %10 = vector.load %arg1[%c0_10, %c256] : memref<32x384xf32, #tpu.memory_space<vmem>>, vector<32x128xf32>
    %cst_11 = arith.constant dense<0.000000e+00> : vector<16x128xf32>
    %11 = tpu.matmul %5, %10, %cst_11 {dimension_numbers = #tpu.dot_dimension_numbers<[1], [0], [0], [1], [0, 0, 1, 1], [], []>} : vector<16x32xf32>, vector<32x128xf32>, vector<16x128xf32> -> vector<16x128xf32>
    %12 = tpu.transpose %7, [1, 0] : vector<16x128xf32> -> vector<128x16xf32>
    %13 = vector.shape_cast %12 : vector<128x16xf32> to vector<8x16x16xf32>
    %14 = tpu.transpose %13, [0, 2, 1] : vector<8x16x16xf32> -> vector<8x16x16xf32>
    %15 = tpu.transpose %9, [1, 0] : vector<16x128xf32> -> vector<128x16xf32>
    %16 = vector.shape_cast %15 : vector<128x16xf32> to vector<8x16x16xf32>
    %17 = tpu.transpose %11, [1, 0] : vector<16x128xf32> -> vector<128x16xf32>
    %18 = vector.shape_cast %17 : vector<128x16xf32> to vector<8x16x16xf32>
    "tpu.trace_start"() <{level = 10 : i32, message = "hqd,hdk->hqk"}> : () -> ()
    %cst_12 = arith.constant dense<0.000000e+00> : vector<8x16x16xf32>
    %19 = tpu.matmul %14, %16, %cst_12 {dimension_numbers = #tpu.dot_dimension_numbers<[2], [1], [1], [2], [0, 0, 0, 1, 1, 2], [0], [0]>} : vector<8x16x16xf32>, vector<8x16x16xf32>, vector<8x16x16xf32> -> vector<8x16x16xf32>
    "tpu.trace_stop"() : () -> ()
    %20 = tpu.iota {dimensions = array<i32: 0>} : vector<16x16xi32>
    %21 = tpu.iota {dimensions = array<i32: 1>} : vector<16x16xi32>
    %c8_i32 = arith.constant 8 : i32
    %22 = vector.broadcast %c8_i32 : i32 to vector<16x16xi32>
    %23 = arith.cmpi sge, %20, %22 : vector<16x16xi32>
    %c8_i32_13 = arith.constant 8 : i32
    %24 = vector.broadcast %c8_i32_13 : i32 to vector<16x16xi32>
    %25 = arith.cmpi sge, %21, %24 : vector<16x16xi32>
    %26 = arith.xori %23, %25 : vector<16x16xi1>
    %cst_14 = arith.constant dense<true> : vector<16x16xi1>
    %27 = arith.xori %26, %cst_14 : vector<16x16xi1>
    %cst_15 = arith.constant 0.000000e+00 : f32
    %cst_16 = arith.constant -1.000000e+30 : f32
    %28 = vector.broadcast %cst_15 : f32 to vector<16x16xf32>
    %29 = vector.broadcast %cst_16 : f32 to vector<16x16xf32>
    %30 = arith.select %27, %28, %29 : vector<16x16xi1>, vector<16x16xf32>
    %31 = vector.shape_cast %30 : vector<16x16xf32> to vector<1x16x16xf32>
    %32 = vector.broadcast %31 : vector<1x16x16xf32> to vector<8x16x16xf32>
    %33 = arith.addf %19, %32 : vector<8x16x16xf32>
    %cst_17 = arith.constant dense<0xFF800000> : vector<8x16xf32>
    %34 = vector.multi_reduction <maximumf>, %33, %cst_17 [2] : vector<8x16x16xf32> to vector<8x16xf32>
    %35 = vector.shape_cast %34 : vector<8x16xf32> to vector<8x16x1xf32>
    %36 = vector.broadcast %35 : vector<8x16x1xf32> to vector<8x16x16xf32>
    %37 = arith.subf %33, %36 : vector<8x16x16xf32>
    %38 = math.exp %37 : vector<8x16x16xf32>
    %cst_18 = arith.constant dense<0.000000e+00> : vector<8x16xf32>
    %39 = vector.multi_reduction <add>, %38, %cst_18 [2] : vector<8x16x16xf32> to vector<8x16xf32>
    %40 = vector.shape_cast %39 : vector<8x16xf32> to vector<8x16x1xf32>
    %41 = tpu.reciprocal %40 : vector<8x16x1xf32> -> vector<8x16x1xf32>
    %42 = vector.broadcast %41 : vector<8x16x1xf32> to vector<8x16x16xf32>
    %43 = arith.mulf %38, %42 : vector<8x16x16xf32>
    "tpu.trace_start"() <{level = 10 : i32, message = "hqk,hdk->hqd"}> : () -> ()
    %cst_19 = arith.constant dense<0.000000e+00> : vector<8x16x16xf32>
    %44 = tpu.matmul %43, %18, %cst_19 {dimension_numbers = #tpu.dot_dimension_numbers<[2], [2], [1], [1], [0, 0, 0, 1, 1, 1], [0], [0]>} : vector<8x16x16xf32>, vector<8x16x16xf32>, vector<8x16x16xf32> -> vector<8x16x16xf32>
    "tpu.trace_stop"() : () -> ()
    %c0_20 = arith.constant 0 : index
    %c0_21 = arith.constant 0 : index
    %45 = vector.load %arg2[%c0_20, %c0_21] : memref<192x32xf32, #tpu.memory_space<vmem>>, vector<128x32xf32>
    %46 = vector.shape_cast %45 : vector<128x32xf32> to vector<8x16x32xf32>
    "tpu.trace_start"() <{level = 10 : i32, message = "hnd,hdo->hno"}> : () -> ()
    %cst_22 = arith.constant dense<0.000000e+00> : vector<8x16x32xf32>
    %47 = tpu.matmul %44, %46, %cst_22 {dimension_numbers = #tpu.dot_dimension_numbers<[2], [1], [1], [2], [0, 0, 0, 1, 1, 2], [0], [0]>} : vector<8x16x16xf32>, vector<8x16x32xf32>, vector<8x16x32xf32> -> vector<8x16x32xf32>
    "tpu.trace_stop"() : () -> ()
    %cst_23 = arith.constant dense<0.000000e+00> : vector<16x32xf32>
    %48 = vector.multi_reduction <add>, %47, %cst_23 [0] : vector<8x16x32xf32> to vector<16x32xf32>
    %49 = arith.addf %1, %48 : vector<16x32xf32>
    %c128_24 = arith.constant 128 : index
    %c0_25 = arith.constant 0 : index
    %50 = vector.load %arg2[%c128_24, %c0_25] : memref<192x32xf32, #tpu.memory_space<vmem>>, vector<32x32xf32>
    %c160 = arith.constant 160 : index
    %c0_26 = arith.constant 0 : index
    %51 = vector.load %arg2[%c160, %c0_26] : memref<192x32xf32, #tpu.memory_space<vmem>>, vector<32x32xf32>
    %c0_27 = arith.constant 0 : index
    %c0_28 = arith.constant 0 : index
    %52 = vector.load %arg3[%c0_27, %c0_28] : memref<2x32xf32, #tpu.memory_space<vmem>>, vector<1x32xf32>
    %c1_29 = arith.constant 1 : index
    %c0_30 = arith.constant 0 : index
    %53 = vector.load %arg3[%c1_29, %c0_30] : memref<2x32xf32, #tpu.memory_space<vmem>>, vector<1x32xf32>
    %cst_31 = arith.constant dense<0.000000e+00> : vector<16x32xf32>
    %54 = tpu.matmul %49, %50, %cst_31 {dimension_numbers = #tpu.dot_dimension_numbers<[1], [0], [0], [1], [0, 0, 1, 1], [], []>} : vector<16x32xf32>, vector<32x32xf32>, vector<16x32xf32> -> vector<16x32xf32>
    %55 = vector.broadcast %52 : vector<1x32xf32> to vector<16x32xf32>
    %56 = arith.addf %54, %55 : vector<16x32xf32>
    %cst_32 = arith.constant 0.000000e+00 : f32
    %57 = vector.broadcast %cst_32 : f32 to vector<16x32xf32>
    %58 = arith.maximumf %56, %57 : vector<16x32xf32>
    %cst_33 = arith.constant dense<0.000000e+00> : vector<16x32xf32>
    %59 = tpu.matmul %58, %51, %cst_33 {dimension_numbers = #tpu.dot_dimension_numbers<[1], [0], [0], [1], [0, 0, 1, 1], [], []>} : vector<16x32xf32>, vector<32x32xf32>, vector<16x32xf32> -> vector<16x32xf32>
    %60 = vector.broadcast %53 : vector<1x32xf32> to vector<16x32xf32>
    %61 = arith.addf %59, %60 : vector<16x32xf32>
    %62 = arith.addf %61, %49 : vector<16x32xf32>
    %c0_34 = arith.constant 0 : index
    %c0_35 = arith.constant 0 : index
    %63 = vector.load %arg4[%c0_34, %c0_35] : memref<16x32xf32, #tpu.memory_space<vmem>>, vector<16x32xf32>
    tpu.vector_store %arg4[%c0_34, %c0_35], %62 {strides = array<i32>} : memref<16x32xf32, #tpu.memory_space<vmem>>, vector<16x32xf32>,
    return
  }
}

</mosaic_0001>

<llo_original>
// kernel: transformer_block.1
$region0: #{transformer_block.1}
  #allocation0 [shape = 'u32[]', space=smem, size = 0x4, offset = 0x4, fixed_abs, tag = 'smem constant byte address 0x4 - core index']
  #allocation1 [shape = 'u32[144,128]{1,0:T(1,128)}', space=vmem, size = 0x12000, scoped, tag = 'internal scratch']
  %s0 = inlined_call_operand.vmem [shape: f32[3,16,32], index: 0, kind: input, shape index: {}]
  %s1 = inlined_call_operand.vmem [shape: f32[32,384], index: 1, kind: input, shape index: {}]
  %s2 = inlined_call_operand.vmem [shape: f32[192,32], index: 2, kind: input, shape index: {}]
  %s3 = inlined_call_operand.vmem [shape: f32[2,32], index: 3, kind: input, shape index: {}]
  %s4 = inlined_call_operand.hbm [shape: f32[16,32], index: 4, kind: output, shape index: {}]
  %s5 = sld [smem:[#allocation0]]
  $region26: #{transformer_block.1} parent=0
    _
  %s7 = ssub.s32 1, %s5
  %s8 = scalar_select 0, %s7, %s5
  $region1: #{transformer_block.1} parent=0
    #allocation2 [shape = 'u8[8192]{0}', space=vmem, size = 0x2000, scoped, tag = 'output window, operand 0, single buffered']
    #allocation3 [shape = 's32[1]{0}', space=sflag, size = 0x4, scoped, tag = 'scoped memory for transformer_block.1']
    %9 = vsyncpa [#allocation3], 0
    // Predicated region
    $region2: #{transformer_block.1} parent=1 // pred_check
      _
    $region3: #{transformer_block.1} parent=1 // pred_check_branch
      %11 = sbr.rel (0) target = $region5
    $region4: #{transformer_block.1} parent=1 // pred_region
      _
    $region5: #{transformer_block.1} parent=1 // pred_fallthru
      _
    // Predicated region
    $region6: #{transformer_block.1} parent=1 // pred_check
      _
    $region7: #{transformer_block.1} parent=1 // pred_check_branch
      %13 = sbr.rel (0) target = $region9
    $region8: #{transformer_block.1} parent=1 // pred_region
      _
    $region9: #{transformer_block.1} parent=1 // pred_fallthru
      _
    // Predicated region
    $region10: #{transformer_block.1} parent=1 // pred_check
      _
    $region11: #{transformer_block.1} parent=1 // pred_check_branch
      %15 = sbr.rel (0) target = $region13
    $region12: #{transformer_block.1} parent=1 // pred_region
      _
    $region13: #{transformer_block.1} parent=1 // pred_fallthru
      _
    // Predicated region
    $region14: #{transformer_block.1} parent=1 // pred_check
      _
    $region15: #{transformer_block.1} parent=1 // pred_check_branch
      %17 = sbr.rel (0) target = $region17
    $region16: #{transformer_block.1} parent=1 // pred_region
      _
    $region17: #{transformer_block.1} parent=1 // pred_fallthru
      _
    %v18 = vld [vmem:[%s0] sm:$0xff]
    %v19 = vld [vmem:[%s0 + $0x8] sm:$0xff]
    %s20 = scalar_lea.vmem %s0, 16
    %v21 = vld [vmem:[%s20] sm:$0xff]
    %v22 = vld [vmem:[%s20 + $0x8] sm:$0xff]
    %s23 = scalar_lea.vmem %s0, 32
    %v24 = vld [vmem:[%s23] sm:$0xff]
    %v25 = vld [vmem:[%s23 + $0x8] sm:$0xff]
    %v26 = vld [vmem:[%s1] sm:$0xff]
    %v27 = vld [vmem:[%s1 + $0x18] sm:$0xff]
    %v28 = vld [vmem:[%s1 + $0x30] sm:$0xff]
    %v29 = vld [vmem:[%s1 + $0x48] sm:$0xff]
    %vm30 = vcmask 261120
    %v32 = vsel %vm30, %v18, 0
    %v35 = vsel %vm30, %v19, 0
    %37 = vmatprep.subr.mxu0 0.0
    %38 = vmatpush1.msra.mxu0 %v26
    %39 = vmatprep.subr.mxu0 0.0
    %40 = vmatpush1.msra.mxu0 %v27
    %41 = vmatprep.subr.mxu0 0.0
    %42 = vmatpush1.msra.mxu0 %v28
    %43 = vmatprep.subr.mxu0 0.0
    %44 = vmatpush1.msra.mxu0 %v29
    %45 = vmatprep.subr.mxu0 0.0
    %46 = vmatpush1.msra.mxu0 0.0
    %47 = vmatprep.subr.mxu0 0.0
    %48 = vmatpush1.msra.mxu0 0.0
    %49 = vmatprep.subr.mxu0 0.0
    %50 = vmatpush1.msra.mxu0 0.0
    %51 = vmatprep.subr.mxu0 0.0
    %52 = vmatpush1.msra.mxu0 0.0
    %53 = vmatprep.subr.mxu0 0.0
    %54 = vmatpush1.msra.mxu0 0.0
    %55 = vmatprep.subr.mxu0 0.0
    %56 = vmatpush1.msra.mxu0 0.0
    %57 = vmatprep.subr.mxu0 0.0
    %58 = vmatpush1.msra.mxu0 0.0
    %59 = vmatprep.subr.mxu0 0.0
    %60 = vmatpush1.msra.mxu0 0.0
    %61 = vmatprep.subr.mxu0 0.0
    %62 = vmatpush1.msra.mxu0 0.0
    %63 = vmatprep.subr.mxu0 0.0
    %64 = vmatpush1.msra.mxu0 0.0
    %65 = vmatprep.subr.mxu0 0.0
    %66 = vmatpush1.msra.mxu0 0.0
    %67 = vmatprep.subr.mxu0 0.0
    %68 = vmatpush1.msra.mxu0 0.0
    %69 = vmatprep.subr.mxu0 0.0
    %70 = vmatpush1.msra.mxu0 0.0
    %71 = vmatprep.subr.mxu0 0.0
    %72 = vmatpush1.msra.mxu0 0.0
    %73 = vmatprep.subr.mxu0 0.0
    %74 = vmatpush1.msra.mxu0 0.0
    %75 = vmatprep.subr.mxu0 0.0
    %76 = vmatpush1.msra.mxu0 0.0
    %77 = vmatprep.subr.mxu0 0.0
    %78 = vmatpush1.msra.mxu0 0.0
    %79 = vmatprep.subr.mxu0 0.0
    %80 = vmatpush1.msra.mxu0 0.0
    %81 = vmatprep.subr.mxu0 0.0
    %82 = vmatpush1.msra.mxu0 0.0
    %83 = vmatprep.subr.mxu0 0.0
    %84 = vmatpush1.msra.mxu0 0.0
    %85 = vmatprep.subr.mxu0 0.0
    %86 = vmatpush1.msra.mxu0 0.0
    %87 = vmatprep.subr.mxu0 0.0
    %88 = vmatpush1.msra.mxu0 0.0
    %89 = vmatprep.subr.mxu0 0.0
    %90 = vmatpush1.msra.mxu0 0.0
    %91 = vmatprep.subr.mxu0 0.0
    %92 = vmatpush1.msra.mxu0 0.0
    %93 = vmatprep.subr.mxu0 0.0
    %94 = vmatpush1.msra.mxu0 0.0
    %95 = vmatprep.subr.mxu0 0.0
    %96 = vmatpush1.msra.mxu0 0.0
    %97 = vmatprep.subr.mxu0 0.0
    %98 = vmatpush1.msra.mxu0 0.0
    %99 = vmatprep.subr.mxu0 0.0
    %100 = vmatpush1.msra.mxu0 0.0
    %101 = vmatprep.mubr.f32.mxu0 0.0
    %102 = vmatmul.mubr.f32.gmra.mrb[0].mxu0 %v32
    %v103 = vpop.f32.mrb[0].mxu0
    %v104 = vadd.f32 0.0, %v103
    %v105 = vpop.f32.mrb[0].mxu0
    %106 = vmatprep.mubr.f32.mxu0 0.0
    %107 = vmatmul.mubr.f32.gmra.mrb[0].mxu0 %v35
    %v108 = vpop.f32.mrb[0].mxu0
    %v109 = vadd.f32 0.0, %v108
    %v110 = vpop.f32.mrb[0].mxu0
    %111 = vdwg.mxu0
    %v112 = vld [vmem:[%s1 + $0x8] sm:$0xff]
    %v113 = vld [vmem:[%s1 + $0x20] sm:$0xff]
    %v114 = vld [vmem:[%s1 + $0x38] sm:$0xff]
    %v115 = vld [vmem:[%s1 + $0x50] sm:$0xff]
    %v117 = vsel %vm30, %v21, 0
    %v120 = vsel %vm30, %v22, 0
    %122 = vmatprep.subr.mxu0 0.0
    %123 = vmatpush1.msra.mxu0 %v112
    %124 = vmatprep.subr.mxu0 0.0
    %125 = vmatpush1.msra.mxu0 %v113
    %126 = vmatprep.subr.mxu0 0.0
    %127 = vmatpush1.msra.mxu0 %v114
    %128 = vmatprep.subr.mxu0 0.0
    %129 = vmatpush1.msra.mxu0 %v115
    %130 = vmatprep.subr.mxu0 0.0
    %131 = vmatpush1.msra.mxu0 0.0
    %132 = vmatprep.subr.mxu0 0.0
    %133 = vmatpush1.msra.mxu0 0.0
    %134 = vmatprep.subr.mxu0 0.0
    %135 = vmatpush1.msra.mxu0 0.0
    %136 = vmatprep.subr.mxu0 0.0
    %137 = vmatpush1.msra.mxu0 0.0
    %138 = vmatprep.subr.mxu0 0.0
    %139 = vmatpush1.msra.mxu0 0.0
    %140 = vmatprep.subr.mxu0 0.0
    %141 = vmatpush1.msra.mxu0 0.0
    %142 = vmatprep.subr.mxu0 0.0
    %143 = vmatpush1.msra.mxu0 0.0
    %144 = vmatprep.subr.mxu0 0.0
    %145 = vmatpush1.msra.mxu0 0.0
    %146 = vmatprep.subr.mxu0 0.0
    %147 = vmatpush1.msra.mxu0 0.0
    %148 = vmatprep.subr.mxu0 0.0
    %149 = vmatpush1.msra.mxu0 0.0
    %150 = vmatprep.subr.mxu0 0.0
    %151 = vmatpush1.msra.mxu0 0.0
    %152 = vmatprep.subr.mxu0 0.0
    %153 = vmatpush1.msra.mxu0 0.0
    %154 = vmatprep.subr.mxu0 0.0
    %155 = vmatpush1.msra.mxu0 0.0
    %156 = vmatprep.subr.mxu0 0.0
    %157 = vmatpush1.msra.mxu0 0.0
    %158 = vmatprep.subr.mxu0 0.0
    %159 = vmatpush1.msra.mxu0 0.0
    %160 = vmatprep.subr.mxu0 0.0
    %161 = vmatpush1.msra.mxu0 0.0
    %162 = vmatprep.subr.mxu0 0.0
    %163 = vmatpush1.msra.mxu0 0.0
    %164 = vmatprep.subr.mxu0 0.0
    %165 = vmatpush1.msra.mxu0 0.0
    %166 = vmatprep.subr.mxu0 0.0
    %167 = vmatpush1.msra.mxu0 0.0
    %168 = vmatprep.subr.mxu0 0.0
    %169 = vmatpush1.msra.mxu0 0.0
    %170 = vmatprep.subr.mxu0 0.0
    %171 = vmatpush1.msra.mxu0 0.0
    %172 = vmatprep.subr.mxu0 0.0
    %173 = vmatpush1.msra.mxu0 0.0
    %174 = vmatprep.subr.mxu0 0.0
    %175 = vmatpush1.msra.mxu0 0.0
    %176 = vmatprep.subr.mxu0 0.0
    %177 = vmatpush1.msra.mxu0 0.0
    %178 = vmatprep.subr.mxu0 0.0
    %179 = vmatpush1.msra.mxu0 0.0
    %180 = vmatprep.subr.mxu0 0.0
    %181 = vmatpush1.msra.mxu0 0.0
    %182 = vmatprep.subr.mxu0 0.0
    %183 = vmatpush1.msra.mxu0 0.0
    %184 = vmatprep.subr.mxu0 0.0
    %185 = vmatpush1.msra.mxu0 0.0
    %186 = vmatprep.mubr.f32.mxu0 0.0
    %187 = vmatmul.mubr.f32.gmra.mrb[0].mxu0 %v117
    %v188 = vpop.f32.mrb[0].mxu0
    %v189 = vadd.f32 0.0, %v188
    %v190 = vpop.f32.mrb[0].mxu0
    %191 = vmatprep.mubr.f32.mxu0 0.0
    %192 = vmatmul.mubr.f32.gmra.mrb[0].mxu0 %v120
    %v193 = vpop.f32.mrb[0].mxu0
    %v194 = vadd.f32 0.0, %v193
    %v195 = vpop.f32.mrb[0].mxu0
    %196 = vdwg.mxu0
    %v197 = vld [vmem:[%s1 + $0x10] sm:$0xff]
    %v198 = vld [vmem:[%s1 + $0x28] sm:$0xff]
    %v199 = vld [vmem:[%s1 + $0x40] sm:$0xff]
    %v200 = vld [vmem:[%s1 + $0x58] sm:$0xff]
    %v202 = vsel %vm30, %v24, 0
    %v205 = vsel %vm30, %v25, 0
    %207 = vmatprep.subr.mxu0 0.0
    %208 = vmatpush1.msra.mxu0 %v197
    %209 = vmatprep.subr.mxu0 0.0
    %210 = vmatpush1.msra.mxu0 %v198
    %211 = vmatprep.subr.mxu0 0.0
    %212 = vmatpush1.msra.mxu0 %v199
    %213 = vmatprep.subr.mxu0 0.0
    %214 = vmatpush1.msra.mxu0 %v200
    %215 = vmatprep.subr.mxu0 0.0
    %216 = vmatpush1.msra.mxu0 0.0
    %217 = vmatprep.subr.mxu0 0.0
    %218 = vmatpush1.msra.mxu0 0.0
    %219 = vmatprep.subr.mxu0 0.0
    %220 = vmatpush1.msra.mxu0 0.0
    %221 = vmatprep.subr.mxu0 0.0
    %222 = vmatpush1.msra.mxu0 0.0
    %223 = vmatprep.subr.mxu0 0.0
    %224 = vmatpush1.msra.mxu0 0.0
    %225 = vmatprep.subr.mxu0 0.0
    %226 = vmatpush1.msra.mxu0 0.0
    %227 = vmatprep.subr.mxu0 0.0
    %228 = vmatpush1.msra.mxu0 0.0
    %229 = vmatprep.subr.mxu0 0.0
    %230 = vmatpush1.msra.mxu0 0.0
    %231 = vmatprep.subr.mxu0 0.0
    %232 = vmatpush1.msra.mxu0 0.0
    %233 = vmatprep.subr.mxu0 0.0
    %234 = vmatpush1.msra.mxu0 0.0
    %235 = vmatprep.subr.mxu0 0.0
    %236 = vmatpush1.msra.mxu0 0.0
    %237 = vmatprep.subr.mxu0 0.0
    %238 = vmatpush1.msra.mxu0 0.0
    %239 = vmatprep.subr.mxu0 0.0
    %240 = vmatpush1.msra.mxu0 0.0
    %241 = vmatprep.subr.mxu0 0.0
    %242 = vmatpush1.msra.mxu0 0.0
    %243 = vmatprep.subr.mxu0 0.0
    %244 = vmatpush1.msra.mxu0 0.0
    %245 = vmatprep.subr.mxu0 0.0
    %246 = vmatpush1.msra.mxu0 0.0
    %247 = vmatprep.subr.mxu0 0.0
    %248 = vmatpush1.msra.mxu0 0.0
    %249 = vmatprep.subr.mxu0 0.0
    %250 = vmatpush1.msra.mxu0 0.0
    %251 = vmatprep.subr.mxu0 0.0
    %252 = vmatpush1.msra.mxu0 0.0
    %253 = vmatprep.subr.mxu0 0.0
    %254 = vmatpush1.msra.mxu0 0.0
    %255 = vmatprep.subr.mxu0 0.0
    %256 = vmatpush1.msra.mxu0 0.0
    %257 = vmatprep.subr.mxu0 0.0
    %258 = vmatpush1.msra.mxu0 0.0
    %259 = vmatprep.subr.mxu0 0.0
    %260 = vmatpush1.msra.mxu0 0.0
    %261 = vmatprep.subr.mxu0 0.0
    %262 = vmatpush1.msra.mxu0 0.0
    %263 = vmatprep.subr.mxu0 0.0
    %264 = vmatpush1.msra.mxu0 0.0
    %265 = vmatprep.subr.mxu0 0.0
    %266 = vmatpush1.msra.mxu0 0.0
    %267 = vmatprep.subr.mxu0 0.0
    %268 = vmatpush1.msra.mxu0 0.0
    %269 = vmatprep.subr.mxu0 0.0
    %270 = vmatpush1.msra.mxu0 0.0
    %271 = vmatprep.mubr.f32.mxu0 0.0
    %272 = vmatmul.mubr.f32.gmra.mrb[0].mxu0 %v202
    %v273 = vpop.f32.mrb[0].mxu0
    %v274 = vadd.f32 0.0, %v273
    %v275 = vpop.f32.mrb[0].mxu0
    %276 = vmatprep.mubr.f32.mxu0 0.0
    %277 = vmatmul.mubr.f32.gmra.mrb[0].mxu0 %v205
    %v278 = vpop.f32.mrb[0].mxu0
    %v279 = vadd.f32 0.0, %v278
    %v280 = vpop.f32.mrb[0].mxu0
    %281 = vdwg.mxu0
    %282 = vxpose.xlu0.b32.start [1/16] %v104, 128
    %283 = vxpose.xlu0.b32.cont [2/16] %v109, 128
    %284 = vxpose.xlu0.b32.cont [3/16] 0.0, 128
    %285 = vxpose.xlu0.b32.cont [4/16] 0.0, 128
    %286 = vxpose.xlu0.b32.cont [5/16] 0.0, 128
    %287 = vxpose.xlu0.b32.cont [6/16] 0.0, 128
    %288 = vxpose.xlu0.b32.cont [7/16] 0.0, 128
    %289 = vxpose.xlu0.b32.cont [8/16] 0.0, 128
    %290 = vxpose.xlu0.b32.cont [9/16] 0.0, 128
    %291 = vxpose.xlu0.b32.cont [10/16] 0.0, 128
    %292 = vxpose.xlu0.b32.cont [11/16] 0.0, 128
    %293 = vxpose.xlu0.b32.cont [12/16] 0.0, 128
    %294 = vxpose.xlu0.b32.cont [13/16] 0.0, 128
    %295 = vxpose.xlu0.b32.cont [14/16] 0.0, 128
    %296 = vxpose.xlu0.b32.cont [15/16] 0.0, 128
    %297 = vxpose.xlu0.b32.end [16/16] 0.0, 128
    %v298 = vpop.trf.xlu0
    %v299 = vpop.trf.xlu0
    %v300 = vpop.trf.xlu0
    %v301 = vpop.trf.xlu0
    %v302 = vpop.trf.xlu0
    %v303 = vpop.trf.xlu0
    %v304 = vpop.trf.xlu0
    %v305 = vpop.trf.xlu0
    %v306 = vpop.trf.xlu0
    %v307 = vpop.trf.xlu0
    %v308 = vpop.trf.xlu0
    %v309 = vpop.trf.xlu0
    %v310 = vpop.trf.xlu0
    %v311 = vpop.trf.xlu0
    %v312 = vpop.trf.xlu0
    %v313 = vpop.trf.xlu0
    %314 = vxpose.xlu0.b32.start [1/16] %v298, 128
    %315 = vxpose.xlu0.b32.cont [2/16] %v299, 128
    %316 = vxpose.xlu0.b32.cont [3/16] 0.0, 128
    %317 = vxpose.xlu0.b32.cont [4/16] 0.0, 128
    %318 = vxpose.xlu0.b32.cont [5/16] 0.0, 128
    %319 = vxpose.xlu0.b32.cont [6/16] 0.0, 128
    %320 = vxpose.xlu0.b32.cont [7/16] 0.0, 128
    %321 = vxpose.xlu0.b32.cont [8/16] 0.0, 128
    %322 = vxpose.xlu0.b32.cont [9/16] 0.0, 128
    %323 = vxpose.xlu0.b32.cont [10/16] 0.0, 128
    %324 = vxpose.xlu0.b32.cont [11/16] 0.0, 128
    %325 = vxpose.xlu0.b32.cont [12/16] 0.0, 128
    %326 = vxpose.xlu0.b32.cont [13/16] 0.0, 128
    %327 = vxpose.xlu0.b32.cont [14/16] 0.0, 128
    %328 = vxpose.xlu0.b32.cont [15/16] 0.0, 128
    %329 = vxpose.xlu0.b32.end [16/16] 0.0, 128
    %v330 = vpop.trf.xlu0
    %v331 = vpop.trf.xlu0
    %v332 = vpop.trf.xlu0
    %v333 = vpop.trf.xlu0
    %v334 = vpop.trf.xlu0
    %v335 = vpop.trf.xlu0
    %v336 = vpop.trf.xlu0
    %v337 = vpop.trf.xlu0
    %v338 = vpop.trf.xlu0
    %v339 = vpop.trf.xlu0
    %v340 = vpop.trf.xlu0
    %v341 = vpop.trf.xlu0
    %v342 = vpop.trf.xlu0
    %v343 = vpop.trf.xlu0
    %v344 = vpop.trf.xlu0
    %v345 = vpop.trf.xlu0
    %346 = vxpose.xlu0.b32.start [1/16] %v300, 128
    %347 = vxpose.xlu0.b32.cont [2/16] %v301, 128
    %348 = vxpose.xlu0.b32.cont [3/16] 0.0, 128
    %349 = vxpose.xlu0.b32.cont [4/16] 0.0, 128
    %350 = vxpose.xlu0.b32.cont [5/16] 0.0, 128
    %351 = vxpose.xlu0.b32.cont [6/16] 0.0, 128
    %352 = vxpose.xlu0.b32.cont [7/16] 0.0, 128
    %353 = vxpose.xlu0.b32.cont [8/16] 0.0, 128
    %354 = vxpose.xlu0.b32.cont [9/16] 0.0, 128
    %355 = vxpose.xlu0.b32.cont [10/16] 0.0, 128
    %356 = vxpose.xlu0.b32.cont [11/16] 0.0, 128
    %357 = vxpose.xlu0.b32.cont [12/16] 0.0, 128
    %358 = vxpose.xlu0.b32.cont [13/16] 0.0, 128
    %359 = vxpose.xlu0.b32.cont [14/16] 0.0, 128
    %360 = vxpose.xlu0.b32.cont [15/16] 0.0, 128
    %361 = vxpose.xlu0.b32.end [16/16] 0.0, 128
    %v362 = vpop.trf.xlu0
    %v363 = vpop.trf.xlu0
    %v364 = vpop.trf.xlu0
    %v365 = vpop.trf.xlu0
    %v366 = vpop.trf.xlu0
    %v367 = vpop.trf.xlu0
    %v368 = vpop.trf.xlu0
    %v369 = vpop.trf.xlu0
    %v370 = vpop.trf.xlu0
    %v371 = vpop.trf.xlu0
    %v372 = vpop.trf.xlu0
    %v373 = vpop.trf.xlu0
    %v374 = vpop.trf.xlu0
    %v375 = vpop.trf.xlu0
    %v376 = vpop.trf.xlu0
    %v377 = vpop.trf.xlu0
    %378 = vxpose.xlu0.b32.start [1/16] %v302, 128
    %379 = vxpose.xlu0.b32.cont [2/16] %v303, 128
    %380 = vxpose.xlu0.b32.cont [3/16] 0.0, 128
    %381 = vxpose.xlu0.b32.cont [4/16] 0.0, 128
    %382 = vxpose.xlu0.b32.cont [5/16] 0.0, 128
    %383 = vxpose.xlu0.b32.cont [6/16] 0.0, 128
    %384 = vxpose.xlu0.b32.cont [7/16] 0.0, 128
    %385 = vxpose.xlu0.b32.cont [8/16] 0.0, 128
    %386 = vxpose.xlu0.b32.cont [9/16] 0.0, 128
    %387 = vxpose.xlu0.b32.cont [10/16] 0.0, 128
    %388 = vxpose.xlu0.b32.cont [11/16] 0.0, 128
    %389 = vxpose.xlu0.b32.cont [12/16] 0.0, 128
    %390 = vxpose.xlu0.b32.cont [13/16] 0.0, 128
    %391 = vxpose.xlu0.b32.cont [14/16] 0.0, 128
    %392 = vxpose.xlu0.b32.cont [15/16] 0.0, 128
    %393 = vxpose.xlu0.b32.end [16/16] 0.0, 128
    %v394 = vpop.trf.xlu0
    %v395 = vpop.trf.xlu0
    %v396 = vpop.trf.xlu0
    %v397 = vpop.trf.xlu0
    %v398 = vpop.trf.xlu0
    %v399 = vpop.trf.xlu0
    %v400 = vpop.trf.xlu0
    %v401 = vpop.trf.xlu0
    %v402 = vpop.trf.xlu0
    %v403 = vpop.trf.xlu0
    %v404 = vpop.trf.xlu0
    %v405 = vpop.trf.xlu0
    %v406 = vpop.trf.xlu0
    %v407 = vpop.trf.xlu0
    %v408 = vpop.trf.xlu0
    %v409 = vpop.trf.xlu0
    %410 = vxpose.xlu0.b32.start [1/16] %v304, 128
    %411 = vxpose.xlu0.b32.cont [2/16] %v305, 128
    %412 = vxpose.xlu0.b32.cont [3/16] 0.0, 128
    %413 = vxpose.xlu0.b32.cont [4/16] 0.0, 128
    %414 = vxpose.xlu0.b32.cont [5/16] 0.0, 128
    %415 = vxpose.xlu0.b32.cont [6/16] 0.0, 128
    %416 = vxpose.xlu0.b32.cont [7/16] 0.0, 128
    %417 = vxpose.xlu0.b32.cont [8/16] 0.0, 128
    %418 = vxpose.xlu0.b32.cont [9/16] 0.0, 128
    %419 = vxpose.xlu0.b32.cont [10/16] 0.0, 128
    %420 = vxpose.xlu0.b32.cont [11/16] 0.0, 128
    %421 = vxpose.xlu0.b32.cont [12/16] 0.0, 128
    %422 = vxpose.xlu0.b32.cont [13/16] 0.0, 128
    %423 = vxpose.xlu0.b32.cont [14/16] 0.0, 128
    %424 = vxpose.xlu0.b32.cont [15/16] 0.0, 128
    %425 = vxpose.xlu0.b32.end [16/16] 0.0, 128
    %v426 = vpop.trf.xlu0
    %v427 = vpop.trf.xlu0
    %v428 = vpop.trf.xlu0
    %v429 = vpop.trf.xlu0
    %v430 = vpop.trf.xlu0
    %v431 = vpop.trf.xlu0
    %v432 = vpop.trf.xlu0
    %v433 = vpop.trf.xlu0
    %v434 = vpop.trf.xlu0
    %v435 = vpop.trf.xlu0
    %v436 = vpop.trf.xlu0
    %v437 = vpop.trf.xlu0
    %v438 = vpop.trf.xlu0
    %v439 = vpop.trf.xlu0
    %v440 = vpop.trf.xlu0
    %v441 = vpop.trf.xlu0
    %442 = vxpose.xlu0.b32.start [1/16] %v306, 128
    %443 = vxpose.xlu0.b32.cont [2/16] %v307, 128
    %444 = vxpose.xlu0.b32.cont [3/16] 0.0, 128
    %445 = vxpose.xlu0.b32.cont [4/16] 0.0, 128
    %446 = vxpose.xlu0.b32.cont [5/16] 0.0, 128
    %447 = vxpose.xlu0.b32.cont [6/16] 0.0, 128
    %448 = vxpose.xlu0.b32.cont [7/16] 0.0, 128
    %449 = vxpose.xlu0.b32.cont [8/16] 0.0, 128
    %450 = vxpose.xlu0.b32.cont [9/16] 0.0, 128
    %451 = vxpose.xlu0.b32.cont [10/16] 0.0, 128
    %452 = vxpose.xlu0.b32.cont [11/16] 0.0, 128
    %453 = vxpose.xlu0.b32.cont [12/16] 0.0, 128
    %454 = vxpose.xlu0.b32.cont [13/16] 0.0, 128
    %455 = vxpose.xlu0.b32.cont [14/16] 0.0, 128
    %456 = vxpose.xlu0.b32.cont [15/16] 0.0, 128
    %457 = vxpose.xlu0.b32.end [16/16] 0.0, 128
    %v458 = vpop.trf.xlu0
    %v459 = vpop.trf.xlu0
    %v460 = vpop.trf.xlu0
    %v461 = vpop.trf.xlu0
    %v462 = vpop.trf.xlu0
    %v463 = vpop.trf.xlu0
    %v464 = vpop.trf.xlu0
    %v465 = vpop.trf.xlu0
    %v466 = vpop.trf.xlu0
    %v467 = vpop.trf.xlu0
    %v468 = vpop.trf.xlu0
    %v469 = vpop.trf.xlu0
    %v470 = vpop.trf.xlu0
    %v471 = vpop.trf.xlu0
    %v472 = vpop.trf.xlu0
    %v473 = vpop.trf.xlu0
    %474 = vxpose.xlu0.b32.start [1/16] %v308, 128
    %475 = vxpose.xlu0.b32.cont [2/16] %v309, 128
    %476 = vxpose.xlu0.b32.cont [3/16] 0.0, 128
    %477 = vxpose.xlu0.b32.cont [4/16] 0.0, 128
    %478 = vxpose.xlu0.b32.cont [5/16] 0.0, 128
    %479 = vxpose.xlu0.b32.cont [6/16] 0.0, 128
    %480 = vxpose.xlu0.b32.cont [7/16] 0.0, 128
    %481 = vxpose.xlu0.b32.cont [8/16] 0.0, 128
    %482 = vxpose.xlu0.b32.cont [9/16] 0.0, 128
    %483 = vxpose.xlu0.b32.cont [10/16] 0.0, 128
    %484 = vxpose.xlu0.b32.cont [11/16] 0.0, 128
    %485 = vxpose.xlu0.b32.cont [12/16] 0.0, 128
    %486 = vxpose.xlu0.b32.cont [13/16] 0.0, 128
    %487 = vxpose.xlu0.b32.cont [14/16] 0.0, 128
    %488 = vxpose.xlu0.b32.cont [15/16] 0.0, 128
    %489 = vxpose.xlu0.b32.end [16/16] 0.0, 128
    %v490 = vpop.trf.xlu0
    %v491 = vpop.trf.xlu0
    %v492 = vpop.trf.xlu0
    %v493 = vpop.trf.xlu0
    %v494 = vpop.trf.xlu0
    %v495 = vpop.trf.xlu0
    %v496 = vpop.trf.xlu0
    %v497 = vpop.trf.xlu0
    %v498 = vpop.trf.xlu0
    %v499 = vpop.trf.xlu0
    %v500 = vpop.trf.xlu0
    %v501 = vpop.trf.xlu0
    %v502 = vpop.trf.xlu0
    %v503 = vpop.trf.xlu0
    %v504 = vpop.trf.xlu0
    %v505 = vpop.trf.xlu0
    %506 = vxpose.xlu0.b32.start [1/16] %v310, 128
    %507 = vxpose.xlu0.b32.cont [2/16] %v311, 128
    %508 = vxpose.xlu0.b32.cont [3/16] 0.0, 128
    %509 = vxpose.xlu0.b32.cont [4/16] 0.0, 128
    %510 = vxpose.xlu0.b32.cont [5/16] 0.0, 128
    %511 = vxpose.xlu0.b32.cont [6/16] 0.0, 128
    %512 = vxpose.xlu0.b32.cont [7/16] 0.0, 128
    %513 = vxpose.xlu0.b32.cont [8/16] 0.0, 128
    %514 = vxpose.xlu0.b32.cont [9/16] 0.0, 128
    %515 = vxpose.xlu0.b32.cont [10/16] 0.0, 128
    %516 = vxpose.xlu0.b32.cont [11/16] 0.0, 128
    %517 = vxpose.xlu0.b32.cont [12/16] 0.0, 128
    %518 = vxpose.xlu0.b32.cont [13/16] 0.0, 128
    %519 = vxpose.xlu0.b32.cont [14/16] 0.0, 128
    %520 = vxpose.xlu0.b32.cont [15/16] 0.0, 128
    %521 = vxpose.xlu0.b32.end [16/16] 0.0, 128
    %v522 = vpop.trf.xlu0
    %v523 = vpop.trf.xlu0
    %v524 = vpop.trf.xlu0
    %v525 = vpop.trf.xlu0
    %v526 = vpop.trf.xlu0
    %v527 = vpop.trf.xlu0
    %v528 = vpop.trf.xlu0
    %v529 = vpop.trf.xlu0
    %v530 = vpop.trf.xlu0
    %v531 = vpop.trf.xlu0
    %v532 = vpop.trf.xlu0
    %v533 = vpop.trf.xlu0
    %v534 = vpop.trf.xlu0
    %v535 = vpop.trf.xlu0
    %v536 = vpop.trf.xlu0
    %v537 = vpop.trf.xlu0
    %538 = vxpose.xlu0.b32.start [1/16] %v312, 128
    %539 = vxpose.xlu0.b32.cont [2/16] %v313, 128
    %540 = vxpose.xlu0.b32.cont [3/16] 0.0, 128
    %541 = vxpose.xlu0.b32.cont [4/16] 0.0, 128
    %542 = vxpose.xlu0.b32.cont [5/16] 0.0, 128
    %543 = vxpose.xlu0.b32.cont [6/16] 0.0, 128
    %544 = vxpose.xlu0.b32.cont [7/16] 0.0, 128
    %545 = vxpose.xlu0.b32.cont [8/16] 0.0, 128
    %546 = vxpose.xlu0.b32.cont [9/16] 0.0, 128
    %547 = vxpose.xlu0.b32.cont [10/16] 0.0, 128
    %548 = vxpose.xlu0.b32.cont [11/16] 0.0, 128
    %549 = vxpose.xlu0.b32.cont [12/16] 0.0, 128
    %550 = vxpose.xlu0.b32.cont [13/16] 0.0, 128
    %551 = vxpose.xlu0.b32.cont [14/16] 0.0, 128
    %552 = vxpose.xlu0.b32.cont [15/16] 0.0, 128
    %553 = vxpose.xlu0.b32.end [16/16] 0.0, 128
    %v554 = vpop.trf.xlu0
    %v555 = vpop.trf.xlu0
    %v556 = vpop.trf.xlu0
    %v557 = vpop.trf.xlu0
    %v558 = vpop.trf.xlu0
    %v559 = vpop.trf.xlu0
    %v560 = vpop.trf.xlu0
    %v561 = vpop.trf.xlu0
    %v562 = vpop.trf.xlu0
    %v563 = vpop.trf.xlu0
    %v564 = vpop.trf.xlu0
    %v565 = vpop.trf.xlu0
    %v566 = vpop.trf.xlu0
    %v567 = vpop.trf.xlu0
    %v568 = vpop.trf.xlu0
    %v569 = vpop.trf.xlu0
    %570 = vxpose.xlu0.b32.start [1/16] %v189, 128
    %571 = vxpose.xlu0.b32.cont [2/16] %v194, 128
    %572 = vxpose.xlu0.b32.cont [3/16] 0.0, 128
    %573 = vxpose.xlu0.b32.cont [4/16] 0.0, 128
    %574 = vxpose.xlu0.b32.cont [5/16] 0.0, 128
    %575 = vxpose.xlu0.b32.cont [6/16] 0.0, 128
    %576 = vxpose.xlu0.b32.cont [7/16] 0.0, 128
    %577 = vxpose.xlu0.b32.cont [8/16] 0.0, 128
    %578 = vxpose.xlu0.b32.cont [9/16] 0.0, 128
    %579 = vxpose.xlu0.b32.cont [10/16] 0.0, 128
    %580 = vxpose.xlu0.b32.cont [11/16] 0.0, 128
    %581 = vxpose.xlu0.b32.cont [12/16] 0.0, 128
    %582 = vxpose.xlu0.b32.cont [13/16] 0.0, 128
    %583 = vxpose.xlu0.b32.cont [14/16] 0.0, 128
    %584 = vxpose.xlu0.b32.cont [15/16] 0.0, 128
    %585 = vxpose.xlu0.b32.end [16/16] 0.0, 128
    %v586 = vpop.trf.xlu0
    %v587 = vpop.trf.xlu0
    %v588 = vpop.trf.xlu0
    %v589 = vpop.trf.xlu0
    %v590 = vpop.trf.xlu0
    %v591 = vpop.trf.xlu0
    %v592 = vpop.trf.xlu0
    %v593 = vpop.trf.xlu0
    %v594 = vpop.trf.xlu0
    %v595 = vpop.trf.xlu0
    %v596 = vpop.trf.xlu0
    %v597 = vpop.trf.xlu0
    %v598 = vpop.trf.xlu0
    %v599 = vpop.trf.xlu0
    %v600 = vpop.trf.xlu0
    %v601 = vpop.trf.xlu0
    %602 = vxpose.xlu0.b32.start [1/16] %v274, 128
    %603 = vxpose.xlu0.b32.cont [2/16] %v279, 128
    %604 = vxpose.xlu0.b32.cont [3/16] 0.0, 128
    %605 = vxpose.xlu0.b32.cont [4/16] 0.0, 128
    %606 = vxpose.xlu0.b32.cont [5/16] 0.0, 128
    %607 = vxpose.xlu0.b32.cont [6/16] 0.0, 128
    %608 = vxpose.xlu0.b32.cont [7/16] 0.0, 128
    %609 = vxpose.xlu0.b32.cont [8/16] 0.0, 128
    %610 = vxpose.xlu0.b32.cont [9/16] 0.0, 128
    %611 = vxpose.xlu0.b32.cont [10/16] 0.0, 128
    %612 = vxpose.xlu0.b32.cont [11/16] 0.0, 128
    %613 = vxpose.xlu0.b32.cont [12/16] 0.0, 128
    %614 = vxpose.xlu0.b32.cont [13/16] 0.0, 128
    %615 = vxpose.xlu0.b32.cont [14/16] 0.0, 128
    %616 = vxpose.xlu0.b32.cont [15/16] 0.0, 128
    %617 = vxpose.xlu0.b32.end [16/16] 0.0, 128
    %v618 = vpop.trf.xlu0
    %v619 = vpop.trf.xlu0
    %v620 = vpop.trf.xlu0
    %v621 = vpop.trf.xlu0
    %v622 = vpop.trf.xlu0
    %v623 = vpop.trf.xlu0
    %v624 = vpop.trf.xlu0
    %v625 = vpop.trf.xlu0
    %v626 = vpop.trf.xlu0
    %v627 = vpop.trf.xlu0
    %v628 = vpop.trf.xlu0
    %v629 = vpop.trf.xlu0
    %v630 = vpop.trf.xlu0
    %v631 = vpop.trf.xlu0
    %v632 = vpop.trf.xlu0
    %v633 = vpop.trf.xlu0
    %v634 = vlaneseq
    %v635 = vshrl.u32 %v634, 7
    %v636 = vadd.s32 %v635, 8
    %v637 = vlaneseq
    %v638 = vand.u32 %v637, 127
    %vm639 = vcmp.ge.s32.totalorder %v635, 8
    %vm640 = vcmp.ge.s32.totalorder %v636, 8
    %vm641 = vcmp.ge.s32.totalorder %v638, 8
    %vm642 = vmxor %vm639, %vm641
    %vm643 = vmxor %vm640, %vm641
    %vm644 = vmxor %vm642, 1
    %vm645 = vmxor %vm643, 1
    %v646 = vsel %vm644, 0.0, -1e+30
    %v647 = vsel %vm645, 0.0, -1e+30
    %vm648 = vcmask 130048
    %v650 = vsel %vm648, %v330, 0
    %v653 = vsel %vm648, %v331, 0
    %655 = vmatprep.subr.mxu0 0.0
    %656 = vmatpush1.msra.mxu0 %v586
    %657 = vmatprep.subr.mxu0 0.0
    %658 = vmatpush1.msra.mxu0 %v587
    %659 = vmatprep.subr.mxu0 0.0
    %660 = vmatpush1.msra.mxu0 0.0
    %661 = vmatprep.subr.mxu0 0.0
    %662 = vmatpush1.msra.mxu0 0.0
    %663 = vmatprep.subr.mxu0 0.0
    %664 = vmatpush1.msra.mxu0 0.0
    %665 = vmatprep.subr.mxu0 0.0
    %666 = vmatpush1.msra.mxu0 0.0
    %667 = vmatprep.subr.mxu0 0.0
    %668 = vmatpush1.msra.mxu0 0.0
    %669 = vmatprep.subr.mxu0 0.0
    %670 = vmatpush1.msra.mxu0 0.0
    %671 = vmatprep.subr.mxu0 0.0
    %672 = vmatpush1.msra.mxu0 0.0
    %673 = vmatprep.subr.mxu0 0.0
    %674 = vmatpush1.msra.mxu0 0.0
    %675 = vmatprep.subr.mxu0 0.0
    %676 = vmatpush1.msra.mxu0 0.0
    %677 = vmatprep.subr.mxu0 0.0
    %678 = vmatpush1.msra.mxu0 0.0
    %679 = vmatprep.subr.mxu0 0.0
    %680 = vmatpush1.msra.mxu0 0.0
    %681 = vmatprep.subr.mxu0 0.0
    %682 = vmatpush1.msra.mxu0 0.0
    %683 = vmatprep.subr.mxu0 0.0
    %684 = vmatpush1.msra.mxu0 0.0
    %685 = vmatprep.subr.mxu0 0.0
    %686 = vmatpush1.msra.mxu0 0.0
    %687 = vmatprep.subr.mxu0 0.0
    %688 = vmatpush1.msra.mxu0 0.0
    %689 = vmatprep.subr.mxu0 0.0
    %690 = vmatpush1.msra.mxu0 0.0
    %691 = vmatprep.subr.mxu0 0.0
    %692 = vmatpush1.msra.mxu0 0.0
    %693 = vmatprep.subr.mxu0 0.0
    %694 = vmatpush1.msra.mxu0 0.0
    %695 = vmatprep.subr.mxu0 0.0
    %696 = vmatpush1.msra.mxu0 0.0
    %697 = vmatprep.subr.mxu0 0.0
    %698 = vmatpush1.msra.mxu0 0.0
    %699 = vmatprep.subr.mxu0 0.0
    %700 = vmatpush1.msra.mxu0 0.0
    %701 = vmatprep.subr.mxu0 0.0
    %702 = vmatpush1.msra.mxu0 0.0
    %703 = vmatprep.subr.mxu0 0.0
    %704 = vmatpush1.msra.mxu0 0.0
    %705 = vmatprep.subr.mxu0 0.0
    %706 = vmatpush1.msra.mxu0 0.0
    %707 = vmatprep.subr.mxu0 0.0
    %708 = vmatpush1.msra.mxu0 0.0
    %709 = vmatprep.subr.mxu0 0.0
    %710 = vmatpush1.msra.mxu0 0.0
    %711 = vmatprep.subr.mxu0 0.0
    %712 = vmatpush1.msra.mxu0 0.0
    %713 = vmatprep.subr.mxu0 0.0
    %714 = vmatpush1.msra.mxu0 0.0
    %715 = vmatprep.subr.mxu0 0.0
    %716 = vmatpush1.msra.mxu0 0.0
    %717 = vmatprep.subr.mxu0 0.0
    %718 = vmatpush1.msra.mxu0 0.0
    %719 = vmatprep.mubr.f32.mxu0 0.0
    %720 = vmatmul.mubr.f32.gmra.mrb[0].mxu0 %v650
    %v721 = vpop.f32.mrb[0].mxu0
    %v722 = vadd.f32 %v646, %v721
    %v723 = vpop.f32.mrb[0].mxu0
    %724 = vmatprep.mubr.f32.mxu0 0.0
    %725 = vmatmul.mubr.f32.gmra.mrb[0].mxu0 %v653
    %v726 = vpop.f32.mrb[0].mxu0
    %v727 = vadd.f32 %v647, %v726
    %v728 = vpop.f32.mrb[0].mxu0
    %729 = vdwg.mxu0
    %v731 = vsel %vm648, %v362, 0
    %v734 = vsel %vm648, %v363, 0
    %736 = vmatprep.subr.mxu0 0.0
    %737 = vmatpush1.msra.mxu0 %v588
    %738 = vmatprep.subr.mxu0 0.0
    %739 = vmatpush1.msra.mxu0 %v589
    %740 = vmatprep.subr.mxu0 0.0
    %741 = vmatpush1.msra.mxu0 0.0
    %742 = vmatprep.subr.mxu0 0.0
    %743 = vmatpush1.msra.mxu0 0.0
    %744 = vmatprep.subr.mxu0 0.0
    %745 = vmatpush1.msra.mxu0 0.0
    %746 = vmatprep.subr.mxu0 0.0
    %747 = vmatpush1.msra.mxu0 0.0
    %748 = vmatprep.subr.mxu0 0.0
    %749 = vmatpush1.msra.mxu0 0.0
    %750 = vmatprep.subr.mxu0 0.0
    %751 = vmatpush1.msra.mxu0 0.0
    %752 = vmatprep.subr.mxu0 0.0
    %753 = vmatpush1.msra.mxu0 0.0
    %754 = vmatprep.subr.mxu0 0.0
    %755 = vmatpush1.msra.mxu0 0.0
    %756 = vmatprep.subr.mxu0 0.0
    %757 = vmatpush1.msra.mxu0 0.0
    %758 = vmatprep.subr.mxu0 0.0
    %759 = vmatpush1.msra.mxu0 0.0
    %760 = vmatprep.subr.mxu0 0.0
    %761 = vmatpush1.msra.mxu0 0.0
    %762 = vmatprep.subr.mxu0 0.0
    %763 = vmatpush1.msra.mxu0 0.0
    %764 = vmatprep.subr.mxu0 0.0
    %765 = vmatpush1.msra.mxu0 0.0
    %766 = vmatprep.subr.mxu0 0.0
    %767 = vmatpush1.msra.mxu0 0.0
    %768 = vmatprep.subr.mxu0 0.0
    %769 = vmatpush1.msra.mxu0 0.0
    %770 = vmatprep.subr.mxu0 0.0
    %771 = vmatpush1.msra.mxu0 0.0
    %772 = vmatprep.subr.mxu0 0.0
    %773 = vmatpush1.msra.mxu0 0.0
    %774 = vmatprep.subr.mxu0 0.0
    %775 = vmatpush1.msra.mxu0 0.0
    %776 = vmatprep.subr.mxu0 0.0
    %777 = vmatpush1.msra.mxu0 0.0
    %778 = vmatprep.subr.mxu0 0.0
    %779 = vmatpush1.msra.mxu0 0.0
    %780 = vmatprep.subr.mxu0 0.0
    %781 = vmatpush1.msra.mxu0 0.0
    %782 = vmatprep.subr.mxu0 0.0
    %783 = vmatpush1.msra.mxu0 0.0
    %784 = vmatprep.subr.mxu0 0.0
    %785 = vmatpush1.msra.mxu0 0.0
    %786 = vmatprep.subr.mxu0 0.0
    %787 = vmatpush1.msra.mxu0 0.0
    %788 = vmatprep.subr.mxu0 0.0
    %789 = vmatpush1.msra.mxu0 0.0
    %790 = vmatprep.subr.mxu0 0.0
    %791 = vmatpush1.msra.mxu0 0.0
    %792 = vmatprep.subr.mxu0 0.0
    %793 = vmatpush1.msra.mxu0 0.0
    %794 = vmatprep.subr.mxu0 0.0
    %795 = vmatpush1.msra.mxu0 0.0
    %796 = vmatprep.subr.mxu0 0.0
    %797 = vmatpush1.msra.mxu0 0.0
    %798 = vmatprep.subr.mxu0 0.0
    %799 = vmatpush1.msra.mxu0 0.0
    %800 = vmatprep.mubr.f32.mxu0 0.0
    %801 = vmatmul.mubr.f32.gmra.mrb[0].mxu0 %v731
    %v802 = vpop.f32.mrb[0].mxu0
    %v803 = vadd.f32 %v646, %v802
    %v804 = vpop.f32.mrb[0].mxu0
    %805 = vmatprep.mubr.f32.mxu0 0.0
    %806 = vmatmul.mubr.f32.gmra.mrb[0].mxu0 %v734
    %v807 = vpop.f32.mrb[0].mxu0
    %v808 = vadd.f32 %v647, %v807
    %v809 = vpop.f32.mrb[0].mxu0
    %810 = vdwg.mxu0
    %v812 = vsel %vm648, %v394, 0
    %v815 = vsel %vm648, %v395, 0
    %817 = vmatprep.subr.mxu0 0.0
    %818 = vmatpush1.msra.mxu0 %v590
    %819 = vmatprep.subr.mxu0 0.0
    %820 = vmatpush1.msra.mxu0 %v591
    %821 = vmatprep.subr.mxu0 0.0
    %822 = vmatpush1.msra.mxu0 0.0
    %823 = vmatprep.subr.mxu0 0.0
    %824 = vmatpush1.msra.mxu0 0.0
    %825 = vmatprep.subr.mxu0 0.0
    %826 = vmatpush1.msra.mxu0 0.0
    %827 = vmatprep.subr.mxu0 0.0
    %828 = vmatpush1.msra.mxu0 0.0
    %829 = vmatprep.subr.mxu0 0.0
    %830 = vmatpush1.msra.mxu0 0.0
    %831 = vmatprep.subr.mxu0 0.0
    %832 = vmatpush1.msra.mxu0 0.0
    %833 = vmatprep.subr.mxu0 0.0
    %834 = vmatpush1.msra.mxu0 0.0
    %835 = vmatprep.subr.mxu0 0.0
    %836 = vmatpush1.msra.mxu0 0.0
    %837 = vmatprep.subr.mxu0 0.0
    %838 = vmatpush1.msra.mxu0 0.0
    %839 = vmatprep.subr.mxu0 0.0
    %840 = vmatpush1.msra.mxu0 0.0
    %841 = vmatprep.subr.mxu0 0.0
    %842 = vmatpush1.msra.mxu0 0.0
    %843 = vmatprep.subr.mxu0 0.0
    %844 = vmatpush1.msra.mxu0 0.0
    %845 = vmatprep.subr.mxu0 0.0
    %846 = vmatpush1.msra.mxu0 0.0
    %847 = vmatprep.subr.mxu0 0.0
    %848 = vmatpush1.msra.mxu0 0.0
    %849 = vmatprep.subr.mxu0 0.0
    %850 = vmatpush1.msra.mxu0 0.0
    %851 = vmatprep.subr.mxu0 0.0
    %852 = vmatpush1.msra.mxu0 0.0
    %853 = vmatprep.subr.mxu0 0.0
    %854 = vmatpush1.msra.mxu0 0.0
    %855 = vmatprep.subr.mxu0 0.0
    %856 = vmatpush1.msra.mxu0 0.0
    %857 = vmatprep.subr.mxu0 0.0
    %858 = vmatpush1.msra.mxu0 0.0
    %859 = vmatprep.subr.mxu0 0.0
    %860 = vmatpush1.msra.mxu0 0.0
    %861 = vmatprep.subr.mxu0 0.0
    %862 = vmatpush1.msra.mxu0 0.0
    %863 = vmatprep.subr.mxu0 0.0
    %864 = vmatpush1.msra.mxu0 0.0
    %865 = vmatprep.subr.mxu0 0.0
    %866 = vmatpush1.msra.mxu0 0.0
    %867 = vmatprep.subr.mxu0 0.0
    %868 = vmatpush1.msra.mxu0 0.0
    %869 = vmatprep.subr.mxu0 0.0
    %870 = vmatpush1.msra.mxu0 0.0
    %871 = vmatprep.subr.mxu0 0.0
    %872 = vmatpush1.msra.mxu0 0.0
    %873 = vmatprep.subr.mxu0 0.0
    %874 = vmatpush1.msra.mxu0 0.0
    %875 = vmatprep.subr.mxu0 0.0
    %876 = vmatpush1.msra.mxu0 0.0
    %877 = vmatprep.subr.mxu0 0.0
    %878 = vmatpush1.msra.mxu0 0.0
    %879 = vmatprep.subr.mxu0 0.0
    %880 = vmatpush1.msra.mxu0 0.0
    %881 = vmatprep.mubr.f32.mxu0 0.0
    %882 = vmatmul.mubr.f32.gmra.mrb[0].mxu0 %v812
    %v883 = vpop.f32.mrb[0].mxu0
    %v884 = vadd.f32 %v646, %v883
    %v885 = vpop.f32.mrb[0].mxu0
    %886 = vmatprep.mubr.f32.mxu0 0.0
    %887 = vmatmul.mubr.f32.gmra.mrb[0].mxu0 %v815
    %v888 = vpop.f32.mrb[0].mxu0
    %v889 = vadd.f32 %v647, %v888
    %v890 = vpop.f32.mrb[0].mxu0
    %891 = vdwg.mxu0
    %v893 = vsel %vm648, %v426, 0
    %v896 = vsel %vm648, %v427, 0
    %898 = vmatprep.subr.mxu0 0.0
    %899 = vmatpush1.msra.mxu0 %v592
    %900 = vmatprep.subr.mxu0 0.0
    %901 = vmatpush1.msra.mxu0 %v593
    %902 = vmatprep.subr.mxu0 0.0
    %903 = vmatpush1.msra.mxu0 0.0
    %904 = vmatprep.subr.mxu0 0.0
    %905 = vmatpush1.msra.mxu0 0.0
    %906 = vmatprep.subr.mxu0 0.0
    %907 = vmatpush1.msra.mxu0 0.0
    %908 = vmatprep.subr.mxu0 0.0
    %909 = vmatpush1.msra.mxu0 0.0
    %910 = vmatprep.subr.mxu0 0.0
    %911 = vmatpush1.msra.mxu0 0.0
    %912 = vmatprep.subr.mxu0 0.0
    %913 = vmatpush1.msra.mxu0 0.0
    %914 = vmatprep.subr.mxu0 0.0
    %915 = vmatpush1.msra.mxu0 0.0
    %916 = vmatprep.subr.mxu0 0.0
    %917 = vmatpush1.msra.mxu0 0.0
    %918 = vmatprep.subr.mxu0 0.0
    %919 = vmatpush1.msra.mxu0 0.0
    %920 = vmatprep.subr.mxu0 0.0
    %921 = vmatpush1.msra.mxu0 0.0
    %922 = vmatprep.subr.mxu0 0.0
    %923 = vmatpush1.msra.mxu0 0.0
    %924 = vmatprep.subr.mxu0 0.0
    %925 = vmatpush1.msra.mxu0 0.0
    %926 = vmatprep.subr.mxu0 0.0
    %927 = vmatpush1.msra.mxu0 0.0
    %928 = vmatprep.subr.mxu0 0.0
    %929 = vmatpush1.msra.mxu0 0.0
    %930 = vmatprep.subr.mxu0 0.0
    %931 = vmatpush1.msra.mxu0 0.0
    %932 = vmatprep.subr.mxu0 0.0
    %933 = vmatpush1.msra.mxu0 0.0
    %934 = vmatprep.subr.mxu0 0.0
    %935 = vmatpush1.msra.mxu0 0.0
    %936 = vmatprep.subr.mxu0 0.0
    %937 = vmatpush1.msra.mxu0 0.0
    %938 = vmatprep.subr.mxu0 0.0
    %939 = vmatpush1.msra.mxu0 0.0
    %940 = vmatprep.subr.mxu0 0.0
    %941 = vmatpush1.msra.mxu0 0.0
    %942 = vmatprep.subr.mxu0 0.0
    %943 = vmatpush1.msra.mxu0 0.0
    %944 = vmatprep.subr.mxu0 0.0
    %945 = vmatpush1.msra.mxu0 0.0
    %946 = vmatprep.subr.mxu0 0.0
    %947 = vmatpush1.msra.mxu0 0.0
    %948 = vmatprep.subr.mxu0 0.0
    %949 = vmatpush1.msra.mxu0 0.0
    %950 = vmatprep.subr.mxu0 0.0
    %951 = vmatpush1.msra.mxu0 0.0
    %952 = vmatprep.subr.mxu0 0.0
    %953 = vmatpush1.msra.mxu0 0.0
    %954 = vmatprep.subr.mxu0 0.0
    %955 = vmatpush1.msra.mxu0 0.0
    %956 = vmatprep.subr.mxu0 0.0
    %957 = vmatpush1.msra.mxu0 0.0
    %958 = vmatprep.subr.mxu0 0.0
    %959 = vmatpush1.msra.mxu0 0.0
    %960 = vmatprep.subr.mxu0 0.0
    %961 = vmatpush1.msra.mxu0 0.0
    %962 = vmatprep.mubr.f32.mxu0 0.0
    %963 = vmatmul.mubr.f32.gmra.mrb[0].mxu0 %v893
    %v964 = vpop.f32.mrb[0].mxu0
    %v965 = vadd.f32 %v646, %v964
    %v966 = vpop.f32.mrb[0].mxu0
    %967 = vmatprep.mubr.f32.mxu0 0.0
    %968 = vmatmul.mubr.f32.gmra.mrb[0].mxu0 %v896
    %v969 = vpop.f32.mrb[0].mxu0
    %v970 = vadd.f32 %v647, %v969
    %v971 = vpop.f32.mrb[0].mxu0
    %972 = vdwg.mxu0
    %v974 = vsel %vm648, %v458, 0
    %v977 = vsel %vm648, %v459, 0
    %979 = vmatprep.subr.mxu0 0.0
    %980 = vmatpush1.msra.mxu0 %v594
    %981 = vmatprep.subr.mxu0 0.0
    %982 = vmatpush1.msra.mxu0 %v595
    %983 = vmatprep.subr.mxu0 0.0
    %984 = vmatpush1.msra.mxu0 0.0
    %985 = vmatprep.subr.mxu0 0.0
    %986 = vmatpush1.msra.mxu0 0.0
    %987 = vmatprep.subr.mxu0 0.0
    %988 = vmatpush1.msra.mxu0 0.0
    %989 = vmatprep.subr.mxu0 0.0
    %990 = vmatpush1.msra.mxu0 0.0
    %991 = vmatprep.subr.mxu0 0.0
    %992 = vmatpush1.msra.mxu0 0.0
    %993 = vmatprep.subr.mxu0 0.0
    %994 = vmatpush1.msra.mxu0 0.0
    %995 = vmatprep.subr.mxu0 0.0
    %996 = vmatpush1.msra.mxu0 0.0
    %997 = vmatprep.subr.mxu0 0.0
    %998 = vmatpush1.msra.mxu0 0.0
    %999 = vmatprep.subr.mxu0 0.0
    %1000 = vmatpush1.msra.mxu0 0.0
    %1001 = vmatprep.subr.mxu0 0.0
    %1002 = vmatpush1.msra.mxu0 0.0
    %1003 = vmatprep.subr.mxu0 0.0
    %1004 = vmatpush1.msra.mxu0 0.0
    %1005 = vmatprep.subr.mxu0 0.0
    %1006 = vmatpush1.msra.mxu0 0.0
    %1007 = vmatprep.subr.mxu0 0.0
    %1008 = vmatpush1.msra.mxu0 0.0
    %1009 = vmatprep.subr.mxu0 0.0
    %1010 = vmatpush1.msra.mxu0 0.0
    %1011 = vmatprep.subr.mxu0 0.0
    %1012 = vmatpush1.msra.mxu0 0.0
    %1013 = vmatprep.subr.mxu0 0.0
    %1014 = vmatpush1.msra.mxu0 0.0
    %1015 = vmatprep.subr.mxu0 0.0
    %1016 = vmatpush1.msra.mxu0 0.0
    %1017 = vmatprep.subr.mxu0 0.0
    %1018 = vmatpush1.msra.mxu0 0.0
    %1019 = vmatprep.subr.mxu0 0.0
    %1020 = vmatpush1.msra.mxu0 0.0
    %1021 = vmatprep.subr.mxu0 0.0
    %1022 = vmatpush1.msra.mxu0 0.0
    %1023 = vmatprep.subr.mxu0 0.0
    %1024 = vmatpush1.msra.mxu0 0.0
    %1025 = vmatprep.subr.mxu0 0.0
    %1026 = vmatpush1.msra.mxu0 0.0
    %1027 = vmatprep.subr.mxu0 0.0
    %1028 = vmatpush1.msra.mxu0 0.0
    %1029 = vmatprep.subr.mxu0 0.0
    %1030 = vmatpush1.msra.mxu0 0.0
    %1031 = vmatprep.subr.mxu0 0.0
    %1032 = vmatpush1.msra.mxu0 0.0
    %1033 = vmatprep.subr.mxu0 0.0
    %1034 = vmatpush1.msra.mxu0 0.0
    %1035 = vmatprep.subr.mxu0 0.0
    %1036 = vmatpush1.msra.mxu0 0.0
    %1037 = vmatprep.subr.mxu0 0.0
    %1038 = vmatpush1.msra.mxu0 0.0
    %1039 = vmatprep.subr.mxu0 0.0
    %1040 = vmatpush1.msra.mxu0 0.0
    %1041 = vmatprep.subr.mxu0 0.0
    %1042 = vmatpush1.msra.mxu0 0.0
    %1043 = vmatprep.mubr.f32.mxu0 0.0
    %1044 = vmatmul.mubr.f32.gmra.mrb[0].mxu0 %v974
    %v1045 = vpop.f32.mrb[0].mxu0
    %v1046 = vadd.f32 %v646, %v1045
    %v1047 = vpop.f32.mrb[0].mxu0
    %1048 = vmatprep.mubr.f32.mxu0 0.0
    %1049 = vmatmul.mubr.f32.gmra.mrb[0].mxu0 %v977
    %v1050 = vpop.f32.mrb[0].mxu0
    %v1051 = vadd.f32 %v647, %v1050
    %v1052 = vpop.f32.mrb[0].mxu0
    %1053 = vdwg.mxu0
    %v1055 = vsel %vm648, %v490, 0
    %v1058 = vsel %vm648, %v491, 0
    %1060 = vmatprep.subr.mxu0 0.0
    %1061 = vmatpush1.msra.mxu0 %v596
    %1062 = vmatprep.subr.mxu0 0.0
    %1063 = vmatpush1.msra.mxu0 %v597
    %1064 = vmatprep.subr.mxu0 0.0
    %1065 = vmatpush1.msra.mxu0 0.0
    %1066 = vmatprep.subr.mxu0 0.0
    %1067 = vmatpush1.msra.mxu0 0.0
    %1068 = vmatprep.subr.mxu0 0.0
    %1069 = vmatpush1.msra.mxu0 0.0
    %1070 = vmatprep.subr.mxu0 0.0
    %1071 = vmatpush1.msra.mxu0 0.0
    %1072 = vmatprep.subr.mxu0 0.0
    %1073 = vmatpush1.msra.mxu0 0.0
    %1074 = vmatprep.subr.mxu0 0.0
    %1075 = vmatpush1.msra.mxu0 0.0
    %1076 = vmatprep.subr.mxu0 0.0
    %1077 = vmatpush1.msra.mxu0 0.0
    %1078 = vmatprep.subr.mxu0 0.0
    %1079 = vmatpush1.msra.mxu0 0.0
    %1080 = vmatprep.subr.mxu0 0.0
    %1081 = vmatpush1.msra.mxu0 0.0
    %1082 = vmatprep.subr.mxu0 0.0
    %1083 = vmatpush1.msra.mxu0 0.0
    %1084 = vmatprep.subr.mxu0 0.0
    %1085 = vmatpush1.msra.mxu0 0.0
    %1086 = vmatprep.subr.mxu0 0.0
    %1087 = vmatpush1.msra.mxu0 0.0
    %1088 = vmatprep.subr.mxu0 0.0
    %1089 = vmatpush1.msra.mxu0 0.0
    %1090 = vmatprep.subr.mxu0 0.0
    %1091 = vmatpush1.msra.mxu0 0.0
    %1092 = vmatprep.subr.mxu0 0.0
    %1093 = vmatpush1.msra.mxu0 0.0
    %1094 = vmatprep.subr.mxu0 0.0
    %1095 = vmatpush1.msra.mxu0 0.0
    %1096 = vmatprep.subr.mxu0 0.0
    %1097 = vmatpush1.msra.mxu0 0.0
    %1098 = vmatprep.subr.mxu0 0.0
    %1099 = vmatpush1.msra.mxu0 0.0
    %1100 = vmatprep.subr.mxu0 0.0
    %1101 = vmatpush1.msra.mxu0 0.0
    %1102 = vmatprep.subr.mxu0 0.0
    %1103 = vmatpush1.msra.mxu0 0.0
    %1104 = vmatprep.subr.mxu0 0.0
    %1105 = vmatpush1.msra.mxu0 0.0
    %1106 = vmatprep.subr.mxu0 0.0
    %1107 = vmatpush1.msra.mxu0 0.0
    %1108 = vmatprep.subr.mxu0 0.0
    %1109 = vmatpush1.msra.mxu0 0.0
    %1110 = vmatprep.subr.mxu0 0.0
    %1111 = vmatpush1.msra.mxu0 0.0
    %1112 = vmatprep.subr.mxu0 0.0
    %1113 = vmatpush1.msra.mxu0 0.0
    %1114 = vmatprep.subr.mxu0 0.0
    %1115 = vmatpush1.msra.mxu0 0.0
    %1116 = vmatprep.subr.mxu0 0.0
    %1117 = vmatpush1.msra.mxu0 0.0
    %1118 = vmatprep.subr.mxu0 0.0
    %1119 = vmatpush1.msra.mxu0 0.0
    %1120 = vmatprep.subr.mxu0 0.0
    %1121 = vmatpush1.msra.mxu0 0.0
    %1122 = vmatprep.subr.mxu0 0.0
    %1123 = vmatpush1.msra.mxu0 0.0
    %1124 = vmatprep.mubr.f32.mxu0 0.0
    %1125 = vmatmul.mubr.f32.gmra.mrb[0].mxu0 %v1055
    %v1126 = vpop.f32.mrb[0].mxu0
    %v1127 = vadd.f32 %v646, %v1126
    %v1128 = vpop.f32.mrb[0].mxu0
    %1129 = vmatprep.mubr.f32.mxu0 0.0
    %1130 = vmatmul.mubr.f32.gmra.mrb[0].mxu0 %v1058
    %v1131 = vpop.f32.mrb[0].mxu0
    %v1132 = vadd.f32 %v647, %v1131
    %v1133 = vpop.f32.mrb[0].mxu0
    %1134 = vdwg.mxu0
    %v1136 = vsel %vm648, %v522, 0
    %v1139 = vsel %vm648, %v523, 0
    %1141 = vmatprep.subr.mxu0 0.0
    %1142 = vmatpush1.msra.mxu0 %v598
    %1143 = vmatprep.subr.mxu0 0.0
    %1144 = vmatpush1.msra.mxu0 %v599
    %1145 = vmatprep.subr.mxu0 0.0
    %1146 = vmatpush1.msra.mxu0 0.0
    %1147 = vmatprep.subr.mxu0 0.0
    %1148 = vmatpush1.msra.mxu0 0.0
    %1149 = vmatprep.subr.mxu0 0.0
    %1150 = vmatpush1.msra.mxu0 0.0
    %1151 = vmatprep.subr.mxu0 0.0
    %1152 = vmatpush1.msra.mxu0 0.0
    %1153 = vmatprep.subr.mxu0 0.0
    %1154 = vmatpush1.msra.mxu0 0.0
    %1155 = vmatprep.subr.mxu0 0.0
    %1156 = vmatpush1.msra.mxu0 0.0
    %1157 = vmatprep.subr.mxu0 0.0
    %1158 = vmatpush1.msra.mxu0 0.0
    %1159 = vmatprep.subr.mxu0 0.0
    %1160 = vmatpush1.msra.mxu0 0.0
    %1161 = vmatprep.subr.mxu0 0.0
    %1162 = vmatpush1.msra.mxu0 0.0
    %1163 = vmatprep.subr.mxu0 0.0
    %1164 = vmatpush1.msra.mxu0 0.0
    %1165 = vmatprep.subr.mxu0 0.0
    %1166 = vmatpush1.msra.mxu0 0.0
    %1167 = vmatprep.subr.mxu0 0.0
    %1168 = vmatpush1.msra.mxu0 0.0
    %1169 = vmatprep.subr.mxu0 0.0
    %1170 = vmatpush1.msra.mxu0 0.0
    %1171 = vmatprep.subr.mxu0 0.0
    %1172 = vmatpush1.msra.mxu0 0.0
    %1173 = vmatprep.subr.mxu0 0.0
    %1174 = vmatpush1.msra.mxu0 0.0
    %1175 = vmatprep.subr.mxu0 0.0
    %1176 = vmatpush1.msra.mxu0 0.0
    %1177 = vmatprep.subr.mxu0 0.0
    %1178 = vmatpush1.msra.mxu0 0.0
    %1179 = vmatprep.subr.mxu0 0.0
    %1180 = vmatpush1.msra.mxu0 0.0
    %1181 = vmatprep.subr.mxu0 0.0
    %1182 = vmatpush1.msra.mxu0 0.0
    %1183 = vmatprep.subr.mxu0 0.0
    %1184 = vmatpush1.msra.mxu0 0.0
    %1185 = vmatprep.subr.mxu0 0.0
    %1186 = vmatpush1.msra.mxu0 0.0
    %1187 = vmatprep.subr.mxu0 0.0
    %1188 = vmatpush1.msra.mxu0 0.0
    %1189 = vmatprep.subr.mxu0 0.0
    %1190 = vmatpush1.msra.mxu0 0.0
    %1191 = vmatprep.subr.mxu0 0.0
    %1192 = vmatpush1.msra.mxu0 0.0
    %1193 = vmatprep.subr.mxu0 0.0
    %1194 = vmatpush1.msra.mxu0 0.0
    %1195 = vmatprep.subr.mxu0 0.0
    %1196 = vmatpush1.msra.mxu0 0.0
    %1197 = vmatprep.subr.mxu0 0.0
    %1198 = vmatpush1.msra.mxu0 0.0
    %1199 = vmatprep.subr.mxu0 0.0
    %1200 = vmatpush1.msra.mxu0 0.0
    %1201 = vmatprep.subr.mxu0 0.0
    %1202 = vmatpush1.msra.mxu0 0.0
    %1203 = vmatprep.subr.mxu0 0.0
    %1204 = vmatpush1.msra.mxu0 0.0
    %1205 = vmatprep.mubr.f32.mxu0 0.0
    %1206 = vmatmul.mubr.f32.gmra.mrb[0].mxu0 %v1136
    %v1207 = vpop.f32.mrb[0].mxu0
    %v1208 = vadd.f32 %v646, %v1207
    %v1209 = vpop.f32.mrb[0].mxu0
    %1210 = vmatprep.mubr.f32.mxu0 0.0
    %1211 = vmatmul.mubr.f32.gmra.mrb[0].mxu0 %v1139
    %v1212 = vpop.f32.mrb[0].mxu0
    %v1213 = vadd.f32 %v647, %v1212
    %v1214 = vpop.f32.mrb[0].mxu0
    %1215 = vdwg.mxu0
    %v1217 = vsel %vm648, %v554, 0
    %v1220 = vsel %vm648, %v555, 0
    %1222 = vmatprep.subr.mxu0 0.0
    %1223 = vmatpush1.msra.mxu0 %v600
    %1224 = vmatprep.subr.mxu0 0.0
    %1225 = vmatpush1.msra.mxu0 %v601
    %1226 = vmatprep.subr.mxu0 0.0
    %1227 = vmatpush1.msra.mxu0 0.0
    %1228 = vmatprep.subr.mxu0 0.0
    %1229 = vmatpush1.msra.mxu0 0.0
    %1230 = vmatprep.subr.mxu0 0.0
    %1231 = vmatpush1.msra.mxu0 0.0
    %1232 = vmatprep.subr.mxu0 0.0
    %1233 = vmatpush1.msra.mxu0 0.0
    %1234 = vmatprep.subr.mxu0 0.0
    %1235 = vmatpush1.msra.mxu0 0.0
    %1236 = vmatprep.subr.mxu0 0.0
    %1237 = vmatpush1.msra.mxu0 0.0
    %1238 = vmatprep.subr.mxu0 0.0
    %1239 = vmatpush1.msra.mxu0 0.0
    %1240 = vmatprep.subr.mxu0 0.0
    %1241 = vmatpush1.msra.mxu0 0.0
    %1242 = vmatprep.subr.mxu0 0.0
    %1243 = vmatpush1.msra.mxu0 0.0
    %1244 = vmatprep.subr.mxu0 0.0
    %1245 = vmatpush1.msra.mxu0 0.0
    %1246 = vmatprep.subr.mxu0 0.0
    %1247 = vmatpush1.msra.mxu0 0.0
    %1248 = vmatprep.subr.mxu0 0.0
    %1249 = vmatpush1.msra.mxu0 0.0
    %1250 = vmatprep.subr.mxu0 0.0
    %1251 = vmatpush1.msra.mxu0 0.0
    %1252 = vmatprep.subr.mxu0 0.0
    %1253 = vmatpush1.msra.mxu0 0.0
    %1254 = vmatprep.subr.mxu0 0.0
    %1255 = vmatpush1.msra.mxu0 0.0
    %1256 = vmatprep.subr.mxu0 0.0
    %1257 = vmatpush1.msra.mxu0 0.0
    %1258 = vmatprep.subr.mxu0 0.0
    %1259 = vmatpush1.msra.mxu0 0.0
    %1260 = vmatprep.subr.mxu0 0.0
    %1261 = vmatpush1.msra.mxu0 0.0
    %1262 = vmatprep.subr.mxu0 0.0
    %1263 = vmatpush1.msra.mxu0 0.0
    %1264 = vmatprep.subr.mxu0 0.0
    %1265 = vmatpush1.msra.mxu0 0.0
    %1266 = vmatprep.subr.mxu0 0.0
    %1267 = vmatpush1.msra.mxu0 0.0
    %1268 = vmatprep.subr.mxu0 0.0
    %1269 = vmatpush1.msra.mxu0 0.0
    %1270 = vmatprep.subr.mxu0 0.0
    %1271 = vmatpush1.msra.mxu0 0.0
    %1272 = vmatprep.subr.mxu0 0.0
    %1273 = vmatpush1.msra.mxu0 0.0
    %1274 = vmatprep.subr.mxu0 0.0
    %1275 = vmatpush1.msra.mxu0 0.0
    %1276 = vmatprep.subr.mxu0 0.0
    %1277 = vmatpush1.msra.mxu0 0.0
    %1278 = vmatprep.subr.mxu0 0.0
    %1279 = vmatpush1.msra.mxu0 0.0
    %1280 = vmatprep.subr.mxu0 0.0
    %1281 = vmatpush1.msra.mxu0 0.0
    %1282 = vmatprep.subr.mxu0 0.0
    %1283 = vmatpush1.msra.mxu0 0.0
    %1284 = vmatprep.subr.mxu0 0.0
    %1285 = vmatpush1.msra.mxu0 0.0
    %1286 = vmatprep.mubr.f32.mxu0 0.0
    %1287 = vmatmul.mubr.f32.gmra.mrb[0].mxu0 %v1217
    %v1288 = vpop.f32.mrb[0].mxu0
    %v1289 = vadd.f32 %v646, %v1288
    %v1290 = vpop.f32.mrb[0].mxu0
    %1291 = vmatprep.mubr.f32.mxu0 0.0
    %1292 = vmatmul.mubr.f32.gmra.mrb[0].mxu0 %v1220
    %v1293 = vpop.f32.mrb[0].mxu0
    %v1294 = vadd.f32 %v647, %v1293
    %v1295 = vpop.f32.mrb[0].mxu0
    %1296 = vdwg.mxu0
    %v1297 = vsel %vm648, %v722, -inf
    %1298 = vmax.xlane.f32.xlu0 %v1297
    %v1299 = vpop.xlane.xlu0 %1298
    %v1300 = vsel %vm648, %v727, -inf
    %1301 = vmax.xlane.f32.xlu0 %v1300
    %v1302 = vpop.xlane.xlu0 %1301
    %v1303 = vsel %vm648, %v803, -inf
    %1304 = vmax.xlane.f32.xlu0 %v1303
    %v1305 = vpop.xlane.xlu0 %1304
    %v1306 = vsel %vm648, %v808, -inf
    %1307 = vmax.xlane.f32.xlu0 %v1306
    %v1308 = vpop.xlane.xlu0 %1307
    %v1309 = vsel %vm648, %v884, -inf
    %1310 = vmax.xlane.f32.xlu0 %v1309
    %v1311 = vpop.xlane.xlu0 %1310
    %v1312 = vsel %vm648, %v889, -inf
    %1313 = vmax.xlane.f32.xlu0 %v1312
    %v1314 = vpop.xlane.xlu0 %1313
    %v1315 = vsel %vm648, %v965, -inf
    %1316 = vmax.xlane.f32.xlu0 %v1315
    %v1317 = vpop.xlane.xlu0 %1316
    %v1318 = vsel %vm648, %v970, -inf
    %1319 = vmax.xlane.f32.xlu0 %v1318
    %v1320 = vpop.xlane.xlu0 %1319
    %v1321 = vsel %vm648, %v1046, -inf
    %1322 = vmax.xlane.f32.xlu0 %v1321
    %v1323 = vpop.xlane.xlu0 %1322
    %v1324 = vsel %vm648, %v1051, -inf
    %1325 = vmax.xlane.f32.xlu0 %v1324
    %v1326 = vpop.xlane.xlu0 %1325
    %v1327 = vsel %vm648, %v1127, -inf
    %1328 = vmax.xlane.f32.xlu0 %v1327
    %v1329 = vpop.xlane.xlu0 %1328
    %v1330 = vsel %vm648, %v1132, -inf
    %1331 = vmax.xlane.f32.xlu0 %v1330
    %v1332 = vpop.xlane.xlu0 %1331
    %v1333 = vsel %vm648, %v1208, -inf
    %1334 = vmax.xlane.f32.xlu0 %v1333
    %v1335 = vpop.xlane.xlu0 %1334
    %v1336 = vsel %vm648, %v1213, -inf
    %1337 = vmax.xlane.f32.xlu0 %v1336
    %v1338 = vpop.xlane.xlu0 %1337
    %v1339 = vsel %vm648, %v1289, -inf
    %1340 = vmax.xlane.f32.xlu0 %v1339
    %v1341 = vpop.xlane.xlu0 %1340
    %v1342 = vsel %vm648, %v1294, -inf
    %1343 = vmax.xlane.f32.xlu0 %v1342
    %v1344 = vpop.xlane.xlu0 %1343
    %v1345 = vsub.f32 %v722, %v1299
    %v1346 = vsub.f32 %v727, %v1302
    %v1347 = vsub.f32 %v803, %v1305
    %v1348 = vsub.f32 %v808, %v1308
    %v1349 = vsub.f32 %v884, %v1311
    %v1350 = vsub.f32 %v889, %v1314
    %v1351 = vsub.f32 %v965, %v1317
    %v1352 = vsub.f32 %v970, %v1320
    %v1353 = vsub.f32 %v1046, %v1323
    %v1354 = vsub.f32 %v1051, %v1326
    %v1355 = vsub.f32 %v1127, %v1329
    %v1356 = vsub.f32 %v1132, %v1332
    %v1357 = vsub.f32 %v1208, %v1335
    %v1358 = vsub.f32 %v1213, %v1338
    %v1359 = vsub.f32 %v1289, %v1341
    %v1360 = vsub.f32 %v1294, %v1344
    %v1361 = vmul.f32 %v1345, 1.442695
    %v1362 = vpow.pop %v1361
    %v1363 = vmul.f32 %v1346, 1.442695
    %v1364 = vpow.pop %v1363
    %v1365 = vmul.f32 %v1347, 1.442695
    %v1366 = vpow.pop %v1365
    %v1367 = vmul.f32 %v1348, 1.442695
    %v1368 = vpow.pop %v1367
    %v1369 = vmul.f32 %v1349, 1.442695
    %v1370 = vpow.pop %v1369
    %v1371 = vmul.f32 %v1350, 1.442695
    %v1372 = vpow.pop %v1371
    %v1373 = vmul.f32 %v1351, 1.442695
    %v1374 = vpow.pop %v1373
    %v1375 = vmul.f32 %v1352, 1.442695
    %v1376 = vpow.pop %v1375
    %v1377 = vmul.f32 %v1353, 1.442695
    %v1378 = vpow.pop %v1377
    %v1379 = vmul.f32 %v1354, 1.442695
    %v1380 = vpow.pop %v1379
    %v1381 = vmul.f32 %v1355, 1.442695
    %v1382 = vpow.pop %v1381
    %v1383 = vmul.f32 %v1356, 1.442695
    %v1384 = vpow.pop %v1383
    %v1385 = vmul.f32 %v1357, 1.442695
    %v1386 = vpow.pop %v1385
    %v1387 = vmul.f32 %v1358, 1.442695
    %v1388 = vpow.pop %v1387
    %v1389 = vmul.f32 %v1359, 1.442695
    %v1390 = vpow.pop %v1389
    %v1391 = vmul.f32 %v1360, 1.442695
    %v1392 = vpow.pop %v1391
    %v1393 = vsel %vm648, %v1362, 0.0
    %1394 = vadd.xlane.f32.xlu0 %v1393
    %v1395 = vpop.xlane.xlu0 %1394
    %v1396 = vsel %vm648, %v1364, 0.0
    %1397 = vadd.xlane.f32.xlu0 %v1396
    %v1398 = vpop.xlane.xlu0 %1397
    %v1399 = vsel %vm648, %v1366, 0.0
    %1400 = vadd.xlane.f32.xlu0 %v1399
    %v1401 = vpop.xlane.xlu0 %1400
    %v1402 = vsel %vm648, %v1368, 0.0
    %1403 = vadd.xlane.f32.xlu0 %v1402
    %v1404 = vpop.xlane.xlu0 %1403
    %v1405 = vsel %vm648, %v1370, 0.0
    %1406 = vadd.xlane.f32.xlu0 %v1405
    %v1407 = vpop.xlane.xlu0 %1406
    %v1408 = vsel %vm648, %v1372, 0.0
    %1409 = vadd.xlane.f32.xlu0 %v1408
    %v1410 = vpop.xlane.xlu0 %1409
    %v1411 = vsel %vm648, %v1374, 0.0
    %1412 = vadd.xlane.f32.xlu0 %v1411
    %v1413 = vpop.xlane.xlu0 %1412
    %v1414 = vsel %vm648, %v1376, 0.0
    %1415 = vadd.xlane.f32.xlu0 %v1414
    %v1416 = vpop.xlane.xlu0 %1415
    %v1417 = vsel %vm648, %v1378, 0.0
    %1418 = vadd.xlane.f32.xlu0 %v1417
    %v1419 = vpop.xlane.xlu0 %1418
    %v1420 = vsel %vm648, %v1380, 0.0
    %1421 = vadd.xlane.f32.xlu0 %v1420
    %v1422 = vpop.xlane.xlu0 %1421
    %v1423 = vsel %vm648, %v1382, 0.0
    %1424 = vadd.xlane.f32.xlu0 %v1423
    %v1425 = vpop.xlane.xlu0 %1424
    %v1426 = vsel %vm648, %v1384, 0.0
    %1427 = vadd.xlane.f32.xlu0 %v1426
    %v1428 = vpop.xlane.xlu0 %1427
    %v1429 = vsel %vm648, %v1386, 0.0
    %1430 = vadd.xlane.f32.xlu0 %v1429
    %v1431 = vpop.xlane.xlu0 %1430
    %v1432 = vsel %vm648, %v1388, 0.0
    %1433 = vadd.xlane.f32.xlu0 %v1432
    %v1434 = vpop.xlane.xlu0 %1433
    %v1435 = vsel %vm648, %v1390, 0.0
    %1436 = vadd.xlane.f32.xlu0 %v1435
    %v1437 = vpop.xlane.xlu0 %1436
    %v1438 = vsel %vm648, %v1392, 0.0
    %1439 = vadd.xlane.f32.xlu0 %v1438
    %v1440 = vpop.xlane.xlu0 %1439
    %v1441 = vrcp.pop %v1395
    %v1442 = vrcp.pop %v1398
    %v1443 = vrcp.pop %v1401
    %v1444 = vrcp.pop %v1404
    %v1445 = vrcp.pop %v1407
    %v1446 = vrcp.pop %v1410
    %v1447 = vrcp.pop %v1413
    %v1448 = vrcp.pop %v1416
    %v1449 = vrcp.pop %v1419
    %v1450 = vrcp.pop %v1422
    %v1451 = vrcp.pop %v1425
    %v1452 = vrcp.pop %v1428
    %v1453 = vrcp.pop %v1431
    %v1454 = vrcp.pop %v1434
    %v1455 = vrcp.pop %v1437
    %v1456 = vrcp.pop %v1440
    %v1457 = vmul.f32 %v1362, %v1441
    %v1458 = vmul.f32 %v1364, %v1442
    %v1459 = vmul.f32 %v1366, %v1443
    %v1460 = vmul.f32 %v1368, %v1444
    %v1461 = vmul.f32 %v1370, %v1445
    %v1462 = vmul.f32 %v1372, %v1446
    %v1463 = vmul.f32 %v1374, %v1447
    %v1464 = vmul.f32 %v1376, %v1448
    %v1465 = vmul.f32 %v1378, %v1449
    %v1466 = vmul.f32 %v1380, %v1450
    %v1467 = vmul.f32 %v1382, %v1451
    %v1468 = vmul.f32 %v1384, %v1452
    %v1469 = vmul.f32 %v1386, %v1453
    %v1470 = vmul.f32 %v1388, %v1454
    %v1471 = vmul.f32 %v1390, %v1455
    %v1472 = vmul.f32 %v1392, %v1456
    %v1474 = vsel %vm648, %v1457, 0
    %v1477 = vsel %vm648, %v1458, 0
    %v1480 = vsel %vm648, %v618, 0
    %v1483 = vsel %vm648, %v619, 0
    %1485 = vmatprep.subr.mxu0 0.0
    %1486 = vmatpush1.xpose.msra.mxu0 %v1480
    %1487 = vmatprep.subr.mxu0 0.0
    %1488 = vmatpush1.xpose.msra.mxu0 %v1483
    %1489 = vmatprep.subr.mxu0 0.0
    %1490 = vmatpush1.xpose.msra.mxu0 0.0
    %1491 = vmatprep.subr.mxu0 0.0
    %1492 = vmatpush1.xpose.msra.mxu0 0.0
    %1493 = vmatprep.subr.mxu0 0.0
    %1494 = vmatpush1.xpose.msra.mxu0 0.0
    %1495 = vmatprep.subr.mxu0 0.0
    %1496 = vmatpush1.xpose.msra.mxu0 0.0
    %1497 = vmatprep.subr.mxu0 0.0
    %1498 = vmatpush1.xpose.msra.mxu0 0.0
    %1499 = vmatprep.subr.mxu0 0.0
    %1500 = vmatpush1.xpose.msra.mxu0 0.0
    %1501 = vmatprep.subr.mxu0 0.0
    %1502 = vmatpush1.xpose.msra.mxu0 0.0
    %1503 = vmatprep.subr.mxu0 0.0
    %1504 = vmatpush1.xpose.msra.mxu0 0.0
    %1505 = vmatprep.subr.mxu0 0.0
    %1506 = vmatpush1.xpose.msra.mxu0 0.0
    %1507 = vmatprep.subr.mxu0 0.0
    %1508 = vmatpush1.xpose.msra.mxu0 0.0
    %1509 = vmatprep.subr.mxu0 0.0
    %1510 = vmatpush1.xpose.msra.mxu0 0.0
    %1511 = vmatprep.subr.mxu0 0.0
    %1512 = vmatpush1.xpose.msra.mxu0 0.0
    %1513 = vmatprep.subr.mxu0 0.0
    %1514 = vmatpush1.xpose.msra.mxu0 0.0
    %1515 = vmatprep.subr.mxu0 0.0
    %1516 = vmatpush1.xpose.msra.mxu0 0.0
    %1517 = vmatprep.subr.mxu0 0.0
    %1518 = vmatpush1.xpose.msra.mxu0 0.0
    %1519 = vmatprep.subr.mxu0 0.0
    %1520 = vmatpush1.xpose.msra.mxu0 0.0
    %1521 = vmatprep.subr.mxu0 0.0
    %1522 = vmatpush1.xpose.msra.mxu0 0.0
    %1523 = vmatprep.subr.mxu0 0.0
    %1524 = vmatpush1.xpose.msra.mxu0 0.0
    %1525 = vmatprep.subr.mxu0 0.0
    %1526 = vmatpush1.xpose.msra.mxu0 0.0
    %1527 = vmatprep.subr.mxu0 0.0
    %1528 = vmatpush1.xpose.msra.mxu0 0.0
    %1529 = vmatprep.subr.mxu0 0.0
    %1530 = vmatpush1.xpose.msra.mxu0 0.0
    %1531 = vmatprep.subr.mxu0 0.0
    %1532 = vmatpush1.xpose.msra.mxu0 0.0
    %1533 = vmatprep.subr.mxu0 0.0
    %1534 = vmatpush1.xpose.msra.mxu0 0.0
    %1535 = vmatprep.subr.mxu0 0.0
    %1536 = vmatpush1.xpose.msra.mxu0 0.0
    %1537 = vmatprep.subr.mxu0 0.0
    %1538 = vmatpush1.xpose.msra.mxu0 0.0
    %1539 = vmatprep.subr.mxu0 0.0
    %1540 = vmatpush1.xpose.msra.mxu0 0.0
    %1541 = vmatprep.subr.mxu0 0.0
    %1542 = vmatpush1.xpose.msra.mxu0 0.0
    %1543 = vmatprep.subr.mxu0 0.0
    %1544 = vmatpush1.xpose.msra.mxu0 0.0
    %1545 = vmatprep.subr.mxu0 0.0
    %1546 = vmatpush1.xpose.msra.mxu0 0.0
    %1547 = vmatprep.subr.mxu0 0.0
    %1548 = vmatpush1.xpose.msra.mxu0 0.0
    %1549 = vmatprep.mubr.f32.mxu0 0.0
    %1550 = vmatmul.mubr.f32.gmra.mrb[0].mxu0 %v1474
    %v1551 = vpop.f32.mrb[0].mxu0
    %v1552 = vadd.f32 0.0, %v1551
    %v1553 = vpop.f32.mrb[0].mxu0
    %1554 = vmatprep.mubr.f32.mxu0 0.0
    %1555 = vmatmul.mubr.f32.gmra.mrb[0].mxu0 %v1477
    %v1556 = vpop.f32.mrb[0].mxu0
    %v1557 = vadd.f32 0.0, %v1556
    %v1558 = vpop.f32.mrb[0].mxu0
    %1559 = vdwg.mxu0
    %v1561 = vsel %vm648, %v1459, 0
    %v1564 = vsel %vm648, %v1460, 0
    %v1567 = vsel %vm648, %v620, 0
    %v1570 = vsel %vm648, %v621, 0
    %1572 = vmatprep.subr.mxu0 0.0
    %1573 = vmatpush1.xpose.msra.mxu0 %v1567
    %1574 = vmatprep.subr.mxu0 0.0
    %1575 = vmatpush1.xpose.msra.mxu0 %v1570
    %1576 = vmatprep.subr.mxu0 0.0
    %1577 = vmatpush1.xpose.msra.mxu0 0.0
    %1578 = vmatprep.subr.mxu0 0.0
    %1579 = vmatpush1.xpose.msra.mxu0 0.0
    %1580 = vmatprep.subr.mxu0 0.0
    %1581 = vmatpush1.xpose.msra.mxu0 0.0
    %1582 = vmatprep.subr.mxu0 0.0
    %1583 = vmatpush1.xpose.msra.mxu0 0.0
    %1584 = vmatprep.subr.mxu0 0.0
    %1585 = vmatpush1.xpose.msra.mxu0 0.0
    %1586 = vmatprep.subr.mxu0 0.0
    %1587 = vmatpush1.xpose.msra.mxu0 0.0
    %1588 = vmatprep.subr.mxu0 0.0
    %1589 = vmatpush1.xpose.msra.mxu0 0.0
    %1590 = vmatprep.subr.mxu0 0.0
    %1591 = vmatpush1.xpose.msra.mxu0 0.0
    %1592 = vmatprep.subr.mxu0 0.0
    %1593 = vmatpush1.xpose.msra.mxu0 0.0
    %1594 = vmatprep.subr.mxu0 0.0
    %1595 = vmatpush1.xpose.msra.mxu0 0.0
    %1596 = vmatprep.subr.mxu0 0.0
    %1597 = vmatpush1.xpose.msra.mxu0 0.0
    %1598 = vmatprep.subr.mxu0 0.0
    %1599 = vmatpush1.xpose.msra.mxu0 0.0
    %1600 = vmatprep.subr.mxu0 0.0
    %1601 = vmatpush1.xpose.msra.mxu0 0.0
    %1602 = vmatprep.subr.mxu0 0.0
    %1603 = vmatpush1.xpose.msra.mxu0 0.0
    %1604 = vmatprep.subr.mxu0 0.0
    %1605 = vmatpush1.xpose.msra.mxu0 0.0
    %1606 = vmatprep.subr.mxu0 0.0
    %1607 = vmatpush1.xpose.msra.mxu0 0.0
    %1608 = vmatprep.subr.mxu0 0.0
    %1609 = vmatpush1.xpose.msra.mxu0 0.0
    %1610 = vmatprep.subr.mxu0 0.0
    %1611 = vmatpush1.xpose.msra.mxu0 0.0
    %1612 = vmatprep.subr.mxu0 0.0
    %1613 = vmatpush1.xpose.msra.mxu0 0.0
    %1614 = vmatprep.subr.mxu0 0.0
    %1615 = vmatpush1.xpose.msra.mxu0 0.0
    %1616 = vmatprep.subr.mxu0 0.0
    %1617 = vmatpush1.xpose.msra.mxu0 0.0
    %1618 = vmatprep.subr.mxu0 0.0
    %1619 = vmatpush1.xpose.msra.mxu0 0.0
    %1620 = vmatprep.subr.mxu0 0.0
    %1621 = vmatpush1.xpose.msra.mxu0 0.0
    %1622 = vmatprep.subr.mxu0 0.0
    %1623 = vmatpush1.xpose.msra.mxu0 0.0
    %1624 = vmatprep.subr.mxu0 0.0
    %1625 = vmatpush1.xpose.msra.mxu0 0.0
    %1626 = vmatprep.subr.mxu0 0.0
    %1627 = vmatpush1.xpose.msra.mxu0 0.0
    %1628 = vmatprep.subr.mxu0 0.0
    %1629 = vmatpush1.xpose.msra.mxu0 0.0
    %1630 = vmatprep.subr.mxu0 0.0
    %1631 = vmatpush1.xpose.msra.mxu0 0.0
    %1632 = vmatprep.subr.mxu0 0.0
    %1633 = vmatpush1.xpose.msra.mxu0 0.0
    %1634 = vmatprep.subr.mxu0 0.0
    %1635 = vmatpush1.xpose.msra.mxu0 0.0
    %1636 = vmatprep.mubr.f32.mxu0 0.0
    %1637 = vmatmul.mubr.f32.gmra.mrb[0].mxu0 %v1561
    %v1638 = vpop.f32.mrb[0].mxu0
    %v1639 = vadd.f32 0.0, %v1638
    %v1640 = vpop.f32.mrb[0].mxu0
    %1641 = vmatprep.mubr.f32.mxu0 0.0
    %1642 = vmatmul.mubr.f32.gmra.mrb[0].mxu0 %v1564
    %v1643 = vpop.f32.mrb[0].mxu0
    %v1644 = vadd.f32 0.0, %v1643
    %v1645 = vpop.f32.mrb[0].mxu0
    %1646 = vdwg.mxu0
    %v1648 = vsel %vm648, %v1461, 0
    %v1651 = vsel %vm648, %v1462, 0
    %v1654 = vsel %vm648, %v622, 0
    %v1657 = vsel %vm648, %v623, 0
    %1659 = vmatprep.subr.mxu0 0.0
    %1660 = vmatpush1.xpose.msra.mxu0 %v1654
    %1661 = vmatprep.subr.mxu0 0.0
    %1662 = vmatpush1.xpose.msra.mxu0 %v1657
    %1663 = vmatprep.subr.mxu0 0.0
    %1664 = vmatpush1.xpose.msra.mxu0 0.0
    %1665 = vmatprep.subr.mxu0 0.0
    %1666 = vmatpush1.xpose.msra.mxu0 0.0
    %1667 = vmatprep.subr.mxu0 0.0
    %1668 = vmatpush1.xpose.msra.mxu0 0.0
    %1669 = vmatprep.subr.mxu0 0.0
    %1670 = vmatpush1.xpose.msra.mxu0 0.0
    %1671 = vmatprep.subr.mxu0 0.0
    %1672 = vmatpush1.xpose.msra.mxu0 0.0
    %1673 = vmatprep.subr.mxu0 0.0
    %1674 = vmatpush1.xpose.msra.mxu0 0.0
    %1675 = vmatprep.subr.mxu0 0.0
    %1676 = vmatpush1.xpose.msra.mxu0 0.0
    %1677 = vmatprep.subr.mxu0 0.0
    %1678 = vmatpush1.xpose.msra.mxu0 0.0
    %1679 = vmatprep.subr.mxu0 0.0
    %1680 = vmatpush1.xpose.msra.mxu0 0.0
    %1681 = vmatprep.subr.mxu0 0.0
    %1682 = vmatpush1.xpose.msra.mxu0 0.0
    %1683 = vmatprep.subr.mxu0 0.0
    %1684 = vmatpush1.xpose.msra.mxu0 0.0
    %1685 = vmatprep.subr.mxu0 0.0
    %1686 = vmatpush1.xpose.msra.mxu0 0.0
    %1687 = vmatprep.subr.mxu0 0.0
    %1688 = vmatpush1.xpose.msra.mxu0 0.0
    %1689 = vmatprep.subr.mxu0 0.0
    %1690 = vmatpush1.xpose.msra.mxu0 0.0
    %1691 = vmatprep.subr.mxu0 0.0
    %1692 = vmatpush1.xpose.msra.mxu0 0.0
    %1693 = vmatprep.subr.mxu0 0.0
    %1694 = vmatpush1.xpose.msra.mxu0 0.0
    %1695 = vmatprep.subr.mxu0 0.0
    %1696 = vmatpush1.xpose.msra.mxu0 0.0
    %1697 = vmatprep.subr.mxu0 0.0
    %1698 = vmatpush1.xpose.msra.mxu0 0.0
    %1699 = vmatprep.subr.mxu0 0.0
    %1700 = vmatpush1.xpose.msra.mxu0 0.0
    %1701 = vmatprep.subr.mxu0 0.0
    %1702 = vmatpush1.xpose.msra.mxu0 0.0
    %1703 = vmatprep.subr.mxu0 0.0
    %1704 = vmatpush1.xpose.msra.mxu0 0.0
    %1705 = vmatprep.subr.mxu0 0.0
    %1706 = vmatpush1.xpose.msra.mxu0 0.0
    %1707 = vmatprep.subr.mxu0 0.0
    %1708 = vmatpush1.xpose.msra.mxu0 0.0
    %1709 = vmatprep.subr.mxu0 0.0
    %1710 = vmatpush1.xpose.msra.mxu0 0.0
    %1711 = vmatprep.subr.mxu0 0.0
    %1712 = vmatpush1.xpose.msra.mxu0 0.0
    %1713 = vmatprep.subr.mxu0 0.0
    %1714 = vmatpush1.xpose.msra.mxu0 0.0
    %1715 = vmatprep.subr.mxu0 0.0
    %1716 = vmatpush1.xpose.msra.mxu0 0.0
    %1717 = vmatprep.subr.mxu0 0.0
    %1718 = vmatpush1.xpose.msra.mxu0 0.0
    %1719 = vmatprep.subr.mxu0 0.0
    %1720 = vmatpush1.xpose.msra.mxu0 0.0
    %1721 = vmatprep.subr.mxu0 0.0
    %1722 = vmatpush1.xpose.msra.mxu0 0.0
    %1723 = vmatprep.mubr.f32.mxu0 0.0
    %1724 = vmatmul.mubr.f32.gmra.mrb[0].mxu0 %v1648
    %v1725 = vpop.f32.mrb[0].mxu0
    %v1726 = vadd.f32 0.0, %v1725
    %v1727 = vpop.f32.mrb[0].mxu0
    %1728 = vmatprep.mubr.f32.mxu0 0.0
    %1729 = vmatmul.mubr.f32.gmra.mrb[0].mxu0 %v1651
    %v1730 = vpop.f32.mrb[0].mxu0
    %v1731 = vadd.f32 0.0, %v1730
    %v1732 = vpop.f32.mrb[0].mxu0
    %1733 = vdwg.mxu0
    %v1735 = vsel %vm648, %v1463, 0
    %v1738 = vsel %vm648, %v1464, 0
    %v1741 = vsel %vm648, %v624, 0
    %v1744 = vsel %vm648, %v625, 0
    %1746 = vmatprep.subr.mxu0 0.0
    %1747 = vmatpush1.xpose.msra.mxu0 %v1741
    %1748 = vmatprep.subr.mxu0 0.0
    %1749 = vmatpush1.xpose.msra.mxu0 %v1744
    %1750 = vmatprep.subr.mxu0 0.0
    %1751 = vmatpush1.xpose.msra.mxu0 0.0
    %1752 = vmatprep.subr.mxu0 0.0
    %1753 = vmatpush1.xpose.msra.mxu0 0.0
    %1754 = vmatprep.subr.mxu0 0.0
    %1755 = vmatpush1.xpose.msra.mxu0 0.0
    %1756 = vmatprep.subr.mxu0 0.0
    %1757 = vmatpush1.xpose.msra.mxu0 0.0
    %1758 = vmatprep.subr.mxu0 0.0
    %1759 = vmatpush1.xpose.msra.mxu0 0.0
    %1760 = vmatprep.subr.mxu0 0.0
    %1761 = vmatpush1.xpose.msra.mxu0 0.0
    %1762 = vmatprep.subr.mxu0 0.0
    %1763 = vmatpush1.xpose.msra.mxu0 0.0
    %1764 = vmatprep.subr.mxu0 0.0
    %1765 = vmatpush1.xpose.msra.mxu0 0.0
    %1766 = vmatprep.subr.mxu0 0.0
    %1767 = vmatpush1.xpose.msra.mxu0 0.0
    %1768 = vmatprep.subr.mxu0 0.0
    %1769 = vmatpush1.xpose.msra.mxu0 0.0
    %1770 = vmatprep.subr.mxu0 0.0
    %1771 = vmatpush1.xpose.msra.mxu0 0.0
    %1772 = vmatprep.subr.mxu0 0.0
    %1773 = vmatpush1.xpose.msra.mxu0 0.0
    %1774 = vmatprep.subr.mxu0 0.0
    %1775 = vmatpush1.xpose.msra.mxu0 0.0
    %1776 = vmatprep.subr.mxu0 0.0
    %1777 = vmatpush1.xpose.msra.mxu0 0.0
    %1778 = vmatprep.subr.mxu0 0.0
    %1779 = vmatpush1.xpose.msra.mxu0 0.0
    %1780 = vmatprep.subr.mxu0 0.0
    %1781 = vmatpush1.xpose.msra.mxu0 0.0
    %1782 = vmatprep.subr.mxu0 0.0
    %1783 = vmatpush1.xpose.msra.mxu0 0.0
    %1784 = vmatprep.subr.mxu0 0.0
    %1785 = vmatpush1.xpose.msra.mxu0 0.0
    %1786 = vmatprep.subr.mxu0 0.0
    %1787 = vmatpush1.xpose.msra.mxu0 0.0
    %1788 = vmatprep.subr.mxu0 0.0
    %1789 = vmatpush1.xpose.msra.mxu0 0.0
    %1790 = vmatprep.subr.mxu0 0.0
    %1791 = vmatpush1.xpose.msra.mxu0 0.0
    %1792 = vmatprep.subr.mxu0 0.0
    %1793 = vmatpush1.xpose.msra.mxu0 0.0
    %1794 = vmatprep.subr.mxu0 0.0
    %1795 = vmatpush1.xpose.msra.mxu0 0.0
    %1796 = vmatprep.subr.mxu0 0.0
    %1797 = vmatpush1.xpose.msra.mxu0 0.0
    %1798 = vmatprep.subr.mxu0 0.0
    %1799 = vmatpush1.xpose.msra.mxu0 0.0
    %1800 = vmatprep.subr.mxu0 0.0
    %1801 = vmatpush1.xpose.msra.mxu0 0.0
    %1802 = vmatprep.subr.mxu0 0.0
    %1803 = vmatpush1.xpose.msra.mxu0 0.0
    %1804 = vmatprep.subr.mxu0 0.0
    %1805 = vmatpush1.xpose.msra.mxu0 0.0
    %1806 = vmatprep.subr.mxu0 0.0
    %1807 = vmatpush1.xpose.msra.mxu0 0.0
    %1808 = vmatprep.subr.mxu0 0.0
    %1809 = vmatpush1.xpose.msra.mxu0 0.0
    %1810 = vmatprep.mubr.f32.mxu0 0.0
    %1811 = vmatmul.mubr.f32.gmra.mrb[0].mxu0 %v1735
    %v1812 = vpop.f32.mrb[0].mxu0
    %v1813 = vadd.f32 0.0, %v1812
    %v1814 = vpop.f32.mrb[0].mxu0
    %1815 = vmatprep.mubr.f32.mxu0 0.0
    %1816 = vmatmul.mubr.f32.gmra.mrb[0].mxu0 %v1738
    %v1817 = vpop.f32.mrb[0].mxu0
    %v1818 = vadd.f32 0.0, %v1817
    %v1819 = vpop.f32.mrb[0].mxu0
    %1820 = vdwg.mxu0
    %v1822 = vsel %vm648, %v1465, 0
    %v1825 = vsel %vm648, %v1466, 0
    %v1828 = vsel %vm648, %v626, 0
    %v1831 = vsel %vm648, %v627, 0
    %1833 = vmatprep.subr.mxu0 0.0
    %1834 = vmatpush1.xpose.msra.mxu0 %v1828
    %1835 = vmatprep.subr.mxu0 0.0
    %1836 = vmatpush1.xpose.msra.mxu0 %v1831
    %1837 = vmatprep.subr.mxu0 0.0
    %1838 = vmatpush1.xpose.msra.mxu0 0.0
    %1839 = vmatprep.subr.mxu0 0.0
    %1840 = vmatpush1.xpose.msra.mxu0 0.0
    %1841 = vmatprep.subr.mxu0 0.0
    %1842 = vmatpush1.xpose.msra.mxu0 0.0
    %1843 = vmatprep.subr.mxu0 0.0
    %1844 = vmatpush1.xpose.msra.mxu0 0.0
    %1845 = vmatprep.subr.mxu0 0.0
    %1846 = vmatpush1.xpose.msra.mxu0 0.0
    %1847 = vmatprep.subr.mxu0 0.0
    %1848 = vmatpush1.xpose.msra.mxu0 0.0
    %1849 = vmatprep.subr.mxu0 0.0
    %1850 = vmatpush1.xpose.msra.mxu0 0.0
    %1851 = vmatprep.subr.mxu0 0.0
    %1852 = vmatpush1.xpose.msra.mxu0 0.0
    %1853 = vmatprep.subr.mxu0 0.0
    %1854 = vmatpush1.xpose.msra.mxu0 0.0
    %1855 = vmatprep.subr.mxu0 0.0
    %1856 = vmatpush1.xpose.msra.mxu0 0.0
    %1857 = vmatprep.subr.mxu0 0.0
    %1858 = vmatpush1.xpose.msra.mxu0 0.0
    %1859 = vmatprep.subr.mxu0 0.0
    %1860 = vmatpush1.xpose.msra.mxu0 0.0
    %1861 = vmatprep.subr.mxu0 0.0
    %1862 = vmatpush1.xpose.msra.mxu0 0.0
    %1863 = vmatprep.subr.mxu0 0.0
    %1864 = vmatpush1.xpose.msra.mxu0 0.0
    %1865 = vmatprep.subr.mxu0 0.0
    %1866 = vmatpush1.xpose.msra.mxu0 0.0
    %1867 = vmatprep.subr.mxu0 0.0
    %1868 = vmatpush1.xpose.msra.mxu0 0.0
    %1869 = vmatprep.subr.mxu0 0.0
    %1870 = vmatpush1.xpose.msra.mxu0 0.0
    %1871 = vmatprep.subr.mxu0 0.0
    %1872 = vmatpush1.xpose.msra.mxu0 0.0
    %1873 = vmatprep.subr.mxu0 0.0
    %1874 = vmatpush1.xpose.msra.mxu0 0.0
    %1875 = vmatprep.subr.mxu0 0.0
    %1876 = vmatpush1.xpose.msra.mxu0 0.0
    %1877 = vmatprep.subr.mxu0 0.0
    %1878 = vmatpush1.xpose.msra.mxu0 0.0
    %1879 = vmatprep.subr.mxu0 0.0
    %1880 = vmatpush1.xpose.msra.mxu0 0.0
    %1881 = vmatprep.subr.mxu0 0.0
    %1882 = vmatpush1.xpose.msra.mxu0 0.0
    %1883 = vmatprep.subr.mxu0 0.0
    %1884 = vmatpush1.xpose.msra.mxu0 0.0
    %1885 = vmatprep.subr.mxu0 0.0
    %1886 = vmatpush1.xpose.msra.mxu0 0.0
    %1887 = vmatprep.subr.mxu0 0.0
    %1888 = vmatpush1.xpose.msra.mxu0 0.0
    %1889 = vmatprep.subr.mxu0 0.0
    %1890 = vmatpush1.xpose.msra.mxu0 0.0
    %1891 = vmatprep.subr.mxu0 0.0
    %1892 = vmatpush1.xpose.msra.mxu0 0.0
    %1893 = vmatprep.subr.mxu0 0.0
    %1894 = vmatpush1.xpose.msra.mxu0 0.0
    %1895 = vmatprep.subr.mxu0 0.0
    %1896 = vmatpush1.xpose.msra.mxu0 0.0
    %1897 = vmatprep.mubr.f32.mxu0 0.0
    %1898 = vmatmul.mubr.f32.gmra.mrb[0].mxu0 %v1822
    %v1899 = vpop.f32.mrb[0].mxu0
    %v1900 = vadd.f32 0.0, %v1899
    %v1901 = vpop.f32.mrb[0].mxu0
    %1902 = vmatprep.mubr.f32.mxu0 0.0
    %1903 = vmatmul.mubr.f32.gmra.mrb[0].mxu0 %v1825
    %v1904 = vpop.f32.mrb[0].mxu0
    %v1905 = vadd.f32 0.0, %v1904
    %v1906 = vpop.f32.mrb[0].mxu0
    %1907 = vdwg.mxu0
    %v1909 = vsel %vm648, %v1467, 0
    %v1912 = vsel %vm648, %v1468, 0
    %v1915 = vsel %vm648, %v628, 0
    %v1918 = vsel %vm648, %v629, 0
    %1920 = vmatprep.subr.mxu0 0.0
    %1921 = vmatpush1.xpose.msra.mxu0 %v1915
    %1922 = vmatprep.subr.mxu0 0.0
    %1923 = vmatpush1.xpose.msra.mxu0 %v1918
    %1924 = vmatprep.subr.mxu0 0.0
    %1925 = vmatpush1.xpose.msra.mxu0 0.0
    %1926 = vmatprep.subr.mxu0 0.0
    %1927 = vmatpush1.xpose.msra.mxu0 0.0
    %1928 = vmatprep.subr.mxu0 0.0
    %1929 = vmatpush1.xpose.msra.mxu0 0.0
    %1930 = vmatprep.subr.mxu0 0.0
    %1931 = vmatpush1.xpose.msra.mxu0 0.0
    %1932 = vmatprep.subr.mxu0 0.0
    %1933 = vmatpush1.xpose.msra.mxu0 0.0
    %1934 = vmatprep.subr.mxu0 0.0
    %1935 = vmatpush1.xpose.msra.mxu0 0.0
    %1936 = vmatprep.subr.mxu0 0.0
    %1937 = vmatpush1.xpose.msra.mxu0 0.0
    %1938 = vmatprep.subr.mxu0 0.0
    %1939 = vmatpush1.xpose.msra.mxu0 0.0
    %1940 = vmatprep.subr.mxu0 0.0
    %1941 = vmatpush1.xpose.msra.mxu0 0.0
    %1942 = vmatprep.subr.mxu0 0.0
    %1943 = vmatpush1.xpose.msra.mxu0 0.0
    %1944 = vmatprep.subr.mxu0 0.0
    %1945 = vmatpush1.xpose.msra.mxu0 0.0
    %1946 = vmatprep.subr.mxu0 0.0
    %1947 = vmatpush1.xpose.msra.mxu0 0.0
    %1948 = vmatprep.subr.mxu0 0.0
    %1949 = vmatpush1.xpose.msra.mxu0 0.0
    %1950 = vmatprep.subr.mxu0 0.0
    %1951 = vmatpush1.xpose.msra.mxu0 0.0
    %1952 = vmatprep.subr.mxu0 0.0
    %1953 = vmatpush1.xpose.msra.mxu0 0.0
    %1954 = vmatprep.subr.mxu0 0.0
    %1955 = vmatpush1.xpose.msra.mxu0 0.0
    %1956 = vmatprep.subr.mxu0 0.0
    %1957 = vmatpush1.xpose.msra.mxu0 0.0
    %1958 = vmatprep.subr.mxu0 0.0
    %1959 = vmatpush1.xpose.msra.mxu0 0.0
    %1960 = vmatprep.subr.mxu0 0.0
    %1961 = vmatpush1.xpose.msra.mxu0 0.0
    %1962 = vmatprep.subr.mxu0 0.0
    %1963 = vmatpush1.xpose.msra.mxu0 0.0
    %1964 = vmatprep.subr.mxu0 0.0
    %1965 = vmatpush1.xpose.msra.mxu0 0.0
    %1966 = vmatprep.subr.mxu0 0.0
    %1967 = vmatpush1.xpose.msra.mxu0 0.0
    %1968 = vmatprep.subr.mxu0 0.0
    %1969 = vmatpush1.xpose.msra.mxu0 0.0
    %1970 = vmatprep.subr.mxu0 0.0
    %1971 = vmatpush1.xpose.msra.mxu0 0.0
    %1972 = vmatprep.subr.mxu0 0.0
    %1973 = vmatpush1.xpose.msra.mxu0 0.0
    %1974 = vmatprep.subr.mxu0 0.0
    %1975 = vmatpush1.xpose.msra.mxu0 0.0
    %1976 = vmatprep.subr.mxu0 0.0
    %1977 = vmatpush1.xpose.msra.mxu0 0.0
    %1978 = vmatprep.subr.mxu0 0.0
    %1979 = vmatpush1.xpose.msra.mxu0 0.0
    %1980 = vmatprep.subr.mxu0 0.0
    %1981 = vmatpush1.xpose.msra.mxu0 0.0
    %1982 = vmatprep.subr.mxu0 0.0
    %1983 = vmatpush1.xpose.msra.mxu0 0.0
    %1984 = vmatprep.mubr.f32.mxu0 0.0
    %1985 = vmatmul.mubr.f32.gmra.mrb[0].mxu0 %v1909
    %v1986 = vpop.f32.mrb[0].mxu0
    %v1987 = vadd.f32 0.0, %v1986
    %v1988 = vpop.f32.mrb[0].mxu0
    %1989 = vmatprep.mubr.f32.mxu0 0.0
    %1990 = vmatmul.mubr.f32.gmra.mrb[0].mxu0 %v1912
    %v1991 = vpop.f32.mrb[0].mxu0
    %v1992 = vadd.f32 0.0, %v1991
    %v1993 = vpop.f32.mrb[0].mxu0
    %1994 = vdwg.mxu0
    %v1996 = vsel %vm648, %v1469, 0
    %v1999 = vsel %vm648, %v1470, 0
    %v2002 = vsel %vm648, %v630, 0
    %v2005 = vsel %vm648, %v631, 0
    %2007 = vmatprep.subr.mxu0 0.0
    %2008 = vmatpush1.xpose.msra.mxu0 %v2002
    %2009 = vmatprep.subr.mxu0 0.0
    %2010 = vmatpush1.xpose.msra.mxu0 %v2005
    %2011 = vmatprep.subr.mxu0 0.0
    %2012 = vmatpush1.xpose.msra.mxu0 0.0
    %2013 = vmatprep.subr.mxu0 0.0
    %2014 = vmatpush1.xpose.msra.mxu0 0.0
    %2015 = vmatprep.subr.mxu0 0.0
    %2016 = vmatpush1.xpose.msra.mxu0 0.0
    %2017 = vmatprep.subr.mxu0 0.0
    %2018 = vmatpush1.xpose.msra.mxu0 0.0
    %2019 = vmatprep.subr.mxu0 0.0
    %2020 = vmatpush1.xpose.msra.mxu0 0.0
    %2021 = vmatprep.subr.mxu0 0.0
    %2022 = vmatpush1.xpose.msra.mxu0 0.0
    %2023 = vmatprep.subr.mxu0 0.0
    %2024 = vmatpush1.xpose.msra.mxu0 0.0
    %2025 = vmatprep.subr.mxu0 0.0
    %2026 = vmatpush1.xpose.msra.mxu0 0.0
    %2027 = vmatprep.subr.mxu0 0.0
    %2028 = vmatpush1.xpose.msra.mxu0 0.0
    %2029 = vmatprep.subr.mxu0 0.0
    %2030 = vmatpush1.xpose.msra.mxu0 0.0
    %2031 = vmatprep.subr.mxu0 0.0
    %2032 = vmatpush1.xpose.msra.mxu0 0.0
    %2033 = vmatprep.subr.mxu0 0.0
    %2034 = vmatpush1.xpose.msra.mxu0 0.0
    %2035 = vmatprep.subr.mxu0 0.0
    %2036 = vmatpush1.xpose.msra.mxu0 0.0
    %2037 = vmatprep.subr.mxu0 0.0
    %2038 = vmatpush1.xpose.msra.mxu0 0.0
    %2039 = vmatprep.subr.mxu0 0.0
    %2040 = vmatpush1.xpose.msra.mxu0 0.0
    %2041 = vmatprep.subr.mxu0 0.0
    %2042 = vmatpush1.xpose.msra.mxu0 0.0
    %2043 = vmatprep.subr.mxu0 0.0
    %2044 = vmatpush1.xpose.msra.mxu0 0.0
    %2045 = vmatprep.subr.mxu0 0.0
    %2046 = vmatpush1.xpose.msra.mxu0 0.0
    %2047 = vmatprep.subr.mxu0 0.0
    %2048 = vmatpush1.xpose.msra.mxu0 0.0
    %2049 = vmatprep.subr.mxu0 0.0
    %2050 = vmatpush1.xpose.msra.mxu0 0.0
    %2051 = vmatprep.subr.mxu0 0.0
    %2052 = vmatpush1.xpose.msra.mxu0 0.0
    %2053 = vmatprep.subr.mxu0 0.0
    %2054 = vmatpush1.xpose.msra.mxu0 0.0
    %2055 = vmatprep.subr.mxu0 0.0
    %2056 = vmatpush1.xpose.msra.mxu0 0.0
    %2057 = vmatprep.subr.mxu0 0.0
    %2058 = vmatpush1.xpose.msra.mxu0 0.0
    %2059 = vmatprep.subr.mxu0 0.0
    %2060 = vmatpush1.xpose.msra.mxu0 0.0
    %2061 = vmatprep.subr.mxu0 0.0
    %2062 = vmatpush1.xpose.msra.mxu0 0.0
    %2063 = vmatprep.subr.mxu0 0.0
    %2064 = vmatpush1.xpose.msra.mxu0 0.0
    %2065 = vmatprep.subr.mxu0 0.0
    %2066 = vmatpush1.xpose.msra.mxu0 0.0
    %2067 = vmatprep.subr.mxu0 0.0
    %2068 = vmatpush1.xpose.msra.mxu0 0.0
    %2069 = vmatprep.subr.mxu0 0.0
    %2070 = vmatpush1.xpose.msra.mxu0 0.0
    %2071 = vmatprep.mubr.f32.mxu0 0.0
    %2072 = vmatmul.mubr.f32.gmra.mrb[0].mxu0 %v1996
    %v2073 = vpop.f32.mrb[0].mxu0
    %v2074 = vadd.f32 0.0, %v2073
    %v2075 = vpop.f32.mrb[0].mxu0
    %2076 = vmatprep.mubr.f32.mxu0 0.0
    %2077 = vmatmul.mubr.f32.gmra.mrb[0].mxu0 %v1999
    %v2078 = vpop.f32.mrb[0].mxu0
    %v2079 = vadd.f32 0.0, %v2078
    %v2080 = vpop.f32.mrb[0].mxu0
    %2081 = vdwg.mxu0
    %v2083 = vsel %vm648, %v1471, 0
    %v2086 = vsel %vm648, %v1472, 0
    %v2089 = vsel %vm648, %v632, 0
    %v2092 = vsel %vm648, %v633, 0
    %2094 = vmatprep.subr.mxu0 0.0
    %2095 = vmatpush1.xpose.msra.mxu0 %v2089
    %2096 = vmatprep.subr.mxu0 0.0
    %2097 = vmatpush1.xpose.msra.mxu0 %v2092
    %2098 = vmatprep.subr.mxu0 0.0
    %2099 = vmatpush1.xpose.msra.mxu0 0.0
    %2100 = vmatprep.subr.mxu0 0.0
    %2101 = vmatpush1.xpose.msra.mxu0 0.0
    %2102 = vmatprep.subr.mxu0 0.0
    %2103 = vmatpush1.xpose.msra.mxu0 0.0
    %2104 = vmatprep.subr.mxu0 0.0
    %2105 = vmatpush1.xpose.msra.mxu0 0.0
    %2106 = vmatprep.subr.mxu0 0.0
    %2107 = vmatpush1.xpose.msra.mxu0 0.0
    %2108 = vmatprep.subr.mxu0 0.0
    %2109 = vmatpush1.xpose.msra.mxu0 0.0
    %2110 = vmatprep.subr.mxu0 0.0
    %2111 = vmatpush1.xpose.msra.mxu0 0.0
    %2112 = vmatprep.subr.mxu0 0.0
    %2113 = vmatpush1.xpose.msra.mxu0 0.0
    %2114 = vmatprep.subr.mxu0 0.0
    %2115 = vmatpush1.xpose.msra.mxu0 0.0
    %2116 = vmatprep.subr.mxu0 0.0
    %2117 = vmatpush1.xpose.msra.mxu0 0.0
    %2118 = vmatprep.subr.mxu0 0.0
    %2119 = vmatpush1.xpose.msra.mxu0 0.0
    %2120 = vmatprep.subr.mxu0 0.0
    %2121 = vmatpush1.xpose.msra.mxu0 0.0
    %2122 = vmatprep.subr.mxu0 0.0
    %2123 = vmatpush1.xpose.msra.mxu0 0.0
    %2124 = vmatprep.subr.mxu0 0.0
    %2125 = vmatpush1.xpose.msra.mxu0 0.0
    %2126 = vmatprep.subr.mxu0 0.0
    %2127 = vmatpush1.xpose.msra.mxu0 0.0
    %2128 = vmatprep.subr.mxu0 0.0
    %2129 = vmatpush1.xpose.msra.mxu0 0.0
    %2130 = vmatprep.subr.mxu0 0.0
    %2131 = vmatpush1.xpose.msra.mxu0 0.0
    %2132 = vmatprep.subr.mxu0 0.0
    %2133 = vmatpush1.xpose.msra.mxu0 0.0
    %2134 = vmatprep.subr.mxu0 0.0
    %2135 = vmatpush1.xpose.msra.mxu0 0.0
    %2136 = vmatprep.subr.mxu0 0.0
    %2137 = vmatpush1.xpose.msra.mxu0 0.0
    %2138 = vmatprep.subr.mxu0 0.0
    %2139 = vmatpush1.xpose.msra.mxu0 0.0
    %2140 = vmatprep.subr.mxu0 0.0
    %2141 = vmatpush1.xpose.msra.mxu0 0.0
    %2142 = vmatprep.subr.mxu0 0.0
    %2143 = vmatpush1.xpose.msra.mxu0 0.0
    %2144 = vmatprep.subr.mxu0 0.0
    %2145 = vmatpush1.xpose.msra.mxu0 0.0
    %2146 = vmatprep.subr.mxu0 0.0
    %2147 = vmatpush1.xpose.msra.mxu0 0.0
    %2148 = vmatprep.subr.mxu0 0.0
    %2149 = vmatpush1.xpose.msra.mxu0 0.0
    %2150 = vmatprep.subr.mxu0 0.0
    %2151 = vmatpush1.xpose.msra.mxu0 0.0
    %2152 = vmatprep.subr.mxu0 0.0
    %2153 = vmatpush1.xpose.msra.mxu0 0.0
    %2154 = vmatprep.subr.mxu0 0.0
    %2155 = vmatpush1.xpose.msra.mxu0 0.0
    %2156 = vmatprep.subr.mxu0 0.0
    %2157 = vmatpush1.xpose.msra.mxu0 0.0
    %2158 = vmatprep.mubr.f32.mxu0 0.0
    %2159 = vmatmul.mubr.f32.gmra.mrb[0].mxu0 %v2083
    %v2160 = vpop.f32.mrb[0].mxu0
    %v2161 = vadd.f32 0.0, %v2160
    %v2162 = vpop.f32.mrb[0].mxu0
    %2163 = vmatprep.mubr.f32.mxu0 0.0
    %2164 = vmatmul.mubr.f32.gmra.mrb[0].mxu0 %v2086
    %v2165 = vpop.f32.mrb[0].mxu0
    %v2166 = vadd.f32 0.0, %v2165
    %v2167 = vpop.f32.mrb[0].mxu0
    %2168 = vdwg.mxu0
    %v2169 = vld [vmem:[%s2] sm:$0xff]
    %v2170 = vld [vmem:[%s2 + $0x8] sm:$0xff]
    %v2171 = vld [vmem:[%s2 + $0x10] sm:$0xff]
    %v2172 = vld [vmem:[%s2 + $0x18] sm:$0xff]
    %v2173 = vld [vmem:[%s2 + $0x20] sm:$0xff]
    %v2174 = vld [vmem:[%s2 + $0x28] sm:$0xff]
    %v2175 = vld [vmem:[%s2 + $0x30] sm:$0xff]
    %v2176 = vld [vmem:[%s2 + $0x38] sm:$0xff]
    %v2177 = vld [vmem:[%s2 + $0x40] sm:$0xff]
    %v2178 = vld [vmem:[%s2 + $0x48] sm:$0xff]
    %v2179 = vld [vmem:[%s2 + $0x50] sm:$0xff]
    %v2180 = vld [vmem:[%s2 + $0x58] sm:$0xff]
    %v2181 = vld [vmem:[%s2 + $0x60] sm:$0xff]
    %v2182 = vld [vmem:[%s2 + $0x68] sm:$0xff]
    %v2183 = vld [vmem:[%s2 + $0x70] sm:$0xff]
    %v2184 = vld [vmem:[%s2 + $0x78] sm:$0xff]
    %v2186 = vsel %vm648, %v1552, 0
    %v2189 = vsel %vm648, %v1557, 0
    %2191 = vmatprep.subr.mxu0 0.0
    %2192 = vmatpush1.msra.mxu0 %v2169
    %2193 = vmatprep.subr.mxu0 0.0
    %2194 = vmatpush1.msra.mxu0 %v2170
    %2195 = vmatprep.subr.mxu0 0.0
    %2196 = vmatpush1.msra.mxu0 0.0
    %2197 = vmatprep.subr.mxu0 0.0
    %2198 = vmatpush1.msra.mxu0 0.0
    %2199 = vmatprep.subr.mxu0 0.0
    %2200 = vmatpush1.msra.mxu0 0.0
    %2201 = vmatprep.subr.mxu0 0.0
    %2202 = vmatpush1.msra.mxu0 0.0
    %2203 = vmatprep.subr.mxu0 0.0
    %2204 = vmatpush1.msra.mxu0 0.0
    %2205 = vmatprep.subr.mxu0 0.0
    %2206 = vmatpush1.msra.mxu0 0.0
    %2207 = vmatprep.subr.mxu0 0.0
    %2208 = vmatpush1.msra.mxu0 0.0
    %2209 = vmatprep.subr.mxu0 0.0
    %2210 = vmatpush1.msra.mxu0 0.0
    %2211 = vmatprep.subr.mxu0 0.0
    %2212 = vmatpush1.msra.mxu0 0.0
    %2213 = vmatprep.subr.mxu0 0.0
    %2214 = vmatpush1.msra.mxu0 0.0
    %2215 = vmatprep.subr.mxu0 0.0
    %2216 = vmatpush1.msra.mxu0 0.0
    %2217 = vmatprep.subr.mxu0 0.0
    %2218 = vmatpush1.msra.mxu0 0.0
    %2219 = vmatprep.subr.mxu0 0.0
    %2220 = vmatpush1.msra.mxu0 0.0
    %2221 = vmatprep.subr.mxu0 0.0
    %2222 = vmatpush1.msra.mxu0 0.0
    %2223 = vmatprep.subr.mxu0 0.0
    %2224 = vmatpush1.msra.mxu0 0.0
    %2225 = vmatprep.subr.mxu0 0.0
    %2226 = vmatpush1.msra.mxu0 0.0
    %2227 = vmatprep.subr.mxu0 0.0
    %2228 = vmatpush1.msra.mxu0 0.0
    %2229 = vmatprep.subr.mxu0 0.0
    %2230 = vmatpush1.msra.mxu0 0.0
    %2231 = vmatprep.subr.mxu0 0.0
    %2232 = vmatpush1.msra.mxu0 0.0
    %2233 = vmatprep.subr.mxu0 0.0
    %2234 = vmatpush1.msra.mxu0 0.0
    %2235 = vmatprep.subr.mxu0 0.0
    %2236 = vmatpush1.msra.mxu0 0.0
    %2237 = vmatprep.subr.mxu0 0.0
    %2238 = vmatpush1.msra.mxu0 0.0
    %2239 = vmatprep.subr.mxu0 0.0
    %2240 = vmatpush1.msra.mxu0 0.0
    %2241 = vmatprep.subr.mxu0 0.0
    %2242 = vmatpush1.msra.mxu0 0.0
    %2243 = vmatprep.subr.mxu0 0.0
    %2244 = vmatpush1.msra.mxu0 0.0
    %2245 = vmatprep.subr.mxu0 0.0
    %2246 = vmatpush1.msra.mxu0 0.0
    %2247 = vmatprep.subr.mxu0 0.0
    %2248 = vmatpush1.msra.mxu0 0.0
    %2249 = vmatprep.subr.mxu0 0.0
    %2250 = vmatpush1.msra.mxu0 0.0
    %2251 = vmatprep.subr.mxu0 0.0
    %2252 = vmatpush1.msra.mxu0 0.0
    %2253 = vmatprep.subr.mxu0 0.0
    %2254 = vmatpush1.msra.mxu0 0.0
    %2255 = vmatprep.mubr.f32.mxu0 0.0
    %2256 = vmatmul.mubr.f32.gmra.mrb[0].mxu0 %v2186
    %v2257 = vpop.f32.mrb[0].mxu0
    %v2258 = vadd.f32 0.0, %v2257
    %v2259 = vpop.f32.mrb[0].mxu0
    %2260 = vmatprep.mubr.f32.mxu0 0.0
    %2261 = vmatmul.mubr.f32.gmra.mrb[0].mxu0 %v2189
    %v2262 = vpop.f32.mrb[0].mxu0
    %v2263 = vadd.f32 0.0, %v2262
    %v2264 = vpop.f32.mrb[0].mxu0
    %2265 = vdwg.mxu0
    %v2267 = vsel %vm648, %v1639, 0
    %v2270 = vsel %vm648, %v1644, 0
    %2272 = vmatprep.subr.mxu0 0.0
    %2273 = vmatpush1.msra.mxu0 %v2171
    %2274 = vmatprep.subr.mxu0 0.0
    %2275 = vmatpush1.msra.mxu0 %v2172
    %2276 = vmatprep.subr.mxu0 0.0
    %2277 = vmatpush1.msra.mxu0 0.0
    %2278 = vmatprep.subr.mxu0 0.0
    %2279 = vmatpush1.msra.mxu0 0.0
    %2280 = vmatprep.subr.mxu0 0.0
    %2281 = vmatpush1.msra.mxu0 0.0
    %2282 = vmatprep.subr.mxu0 0.0
    %2283 = vmatpush1.msra.mxu0 0.0
    %2284 = vmatprep.subr.mxu0 0.0
    %2285 = vmatpush1.msra.mxu0 0.0
    %2286 = vmatprep.subr.mxu0 0.0
    %2287 = vmatpush1.msra.mxu0 0.0
    %2288 = vmatprep.subr.mxu0 0.0
    %2289 = vmatpush1.msra.mxu0 0.0
    %2290 = vmatprep.subr.mxu0 0.0
    %2291 = vmatpush1.msra.mxu0 0.0
    %2292 = vmatprep.subr.mxu0 0.0
    %2293 = vmatpush1.msra.mxu0 0.0
    %2294 = vmatprep.subr.mxu0 0.0
    %2295 = vmatpush1.msra.mxu0 0.0
    %2296 = vmatprep.subr.mxu0 0.0
    %2297 = vmatpush1.msra.mxu0 0.0
    %2298 = vmatprep.subr.mxu0 0.0
    %2299 = vmatpush1.msra.mxu0 0.0
    %2300 = vmatprep.subr.mxu0 0.0
    %2301 = vmatpush1.msra.mxu0 0.0
    %2302 = vmatprep.subr.mxu0 0.0
    %2303 = vmatpush1.msra.mxu0 0.0
    %2304 = vmatprep.subr.mxu0 0.0
    %2305 = vmatpush1.msra.mxu0 0.0
    %2306 = vmatprep.subr.mxu0 0.0
    %2307 = vmatpush1.msra.mxu0 0.0
    %2308 = vmatprep.subr.mxu0 0.0
    %2309 = vmatpush1.msra.mxu0 0.0
    %2310 = vmatprep.subr.mxu0 0.0
    %2311 = vmatpush1.msra.mxu0 0.0
    %2312 = vmatprep.subr.mxu0 0.0
    %2313 = vmatpush1.msra.mxu0 0.0
    %2314 = vmatprep.subr.mxu0 0.0
    %2315 = vmatpush1.msra.mxu0 0.0
    %2316 = vmatprep.subr.mxu0 0.0
    %2317 = vmatpush1.msra.mxu0 0.0
    %2318 = vmatprep.subr.mxu0 0.0
    %2319 = vmatpush1.msra.mxu0 0.0
    %2320 = vmatprep.subr.mxu0 0.0
    %2321 = vmatpush1.msra.mxu0 0.0
    %2322 = vmatprep.subr.mxu0 0.0
    %2323 = vmatpush1.msra.mxu0 0.0
    %2324 = vmatprep.subr.mxu0 0.0
    %2325 = vmatpush1.msra.mxu0 0.0
    %2326 = vmatprep.subr.mxu0 0.0
    %2327 = vmatpush1.msra.mxu0 0.0
    %2328 = vmatprep.subr.mxu0 0.0
    %2329 = vmatpush1.msra.mxu0 0.0
    %2330 = vmatprep.subr.mxu0 0.0
    %2331 = vmatpush1.msra.mxu0 0.0
    %2332 = vmatprep.subr.mxu0 0.0
    %2333 = vmatpush1.msra.mxu0 0.0
    %2334 = vmatprep.subr.mxu0 0.0
    %2335 = vmatpush1.msra.mxu0 0.0
    %2336 = vmatprep.mubr.f32.mxu0 0.0
    %2337 = vmatmul.mubr.f32.gmra.mrb[0].mxu0 %v2267
    %v2338 = vpop.f32.mrb[0].mxu0
    %v2339 = vadd.f32 0.0, %v2338
    %v2340 = vpop.f32.mrb[0].mxu0
    %2341 = vmatprep.mubr.f32.mxu0 0.0
    %2342 = vmatmul.mubr.f32.gmra.mrb[0].mxu0 %v2270
    %v2343 = vpop.f32.mrb[0].mxu0
    %v2344 = vadd.f32 0.0, %v2343
    %v2345 = vpop.f32.mrb[0].mxu0
    %2346 = vdwg.mxu0
    %v2348 = vsel %vm648, %v1726, 0
    %v2351 = vsel %vm648, %v1731, 0
    %2353 = vmatprep.subr.mxu0 0.0
    %2354 = vmatpush1.msra.mxu0 %v2173
    %2355 = vmatprep.subr.mxu0 0.0
    %2356 = vmatpush1.msra.mxu0 %v2174
    %2357 = vmatprep.subr.mxu0 0.0
    %2358 = vmatpush1.msra.mxu0 0.0
    %2359 = vmatprep.subr.mxu0 0.0
    %2360 = vmatpush1.msra.mxu0 0.0
    %2361 = vmatprep.subr.mxu0 0.0
    %2362 = vmatpush1.msra.mxu0 0.0
    %2363 = vmatprep.subr.mxu0 0.0
    %2364 = vmatpush1.msra.mxu0 0.0
    %2365 = vmatprep.subr.mxu0 0.0
    %2366 = vmatpush1.msra.mxu0 0.0
    %2367 = vmatprep.subr.mxu0 0.0
    %2368 = vmatpush1.msra.mxu0 0.0
    %2369 = vmatprep.subr.mxu0 0.0
    %2370 = vmatpush1.msra.mxu0 0.0
    %2371 = vmatprep.subr.mxu0 0.0
    %2372 = vmatpush1.msra.mxu0 0.0
    %2373 = vmatprep.subr.mxu0 0.0
    %2374 = vmatpush1.msra.mxu0 0.0
    %2375 = vmatprep.subr.mxu0 0.0
    %2376 = vmatpush1.msra.mxu0 0.0
    %2377 = vmatprep.subr.mxu0 0.0
    %2378 = vmatpush1.msra.mxu0 0.0
    %2379 = vmatprep.subr.mxu0 0.0
    %2380 = vmatpush1.msra.mxu0 0.0
    %2381 = vmatprep.subr.mxu0 0.0
    %2382 = vmatpush1.msra.mxu0 0.0
    %2383 = vmatprep.subr.mxu0 0.0
    %2384 = vmatpush1.msra.mxu0 0.0
    %2385 = vmatprep.subr.mxu0 0.0
    %2386 = vmatpush1.msra.mxu0 0.0
    %2387 = vmatprep.subr.mxu0 0.0
    %2388 = vmatpush1.msra.mxu0 0.0
    %2389 = vmatprep.subr.mxu0 0.0
    %2390 = vmatpush1.msra.mxu0 0.0
    %2391 = vmatprep.subr.mxu0 0.0
    %2392 = vmatpush1.msra.mxu0 0.0
    %2393 = vmatprep.subr.mxu0 0.0
    %2394 = vmatpush1.msra.mxu0 0.0
    %2395 = vmatprep.subr.mxu0 0.0
    %2396 = vmatpush1.msra.mxu0 0.0
    %2397 = vmatprep.subr.mxu0 0.0
    %2398 = vmatpush1.msra.mxu0 0.0
    %2399 = vmatprep.subr.mxu0 0.0
    %2400 = vmatpush1.msra.mxu0 0.0
    %2401 = vmatprep.subr.mxu0 0.0
    %2402 = vmatpush1.msra.mxu0 0.0
    %2403 = vmatprep.subr.mxu0 0.0
    %2404 = vmatpush1.msra.mxu0 0.0
    %2405 = vmatprep.subr.mxu0 0.0
    %2406 = vmatpush1.msra.mxu0 0.0
    %2407 = vmatprep.subr.mxu0 0.0
    %2408 = vmatpush1.msra.mxu0 0.0
    %2409 = vmatprep.subr.mxu0 0.0
    %2410 = vmatpush1.msra.mxu0 0.0
    %2411 = vmatprep.subr.mxu0 0.0
    %2412 = vmatpush1.msra.mxu0 0.0
    %2413 = vmatprep.subr.mxu0 0.0
    %2414 = vmatpush1.msra.mxu0 0.0
    %2415 = vmatprep.subr.mxu0 0.0
    %2416 = vmatpush1.msra.mxu0 0.0
    %2417 = vmatprep.mubr.f32.mxu0 0.0
    %2418 = vmatmul.mubr.f32.gmra.mrb[0].mxu0 %v2348
    %v2419 = vpop.f32.mrb[0].mxu0
    %v2420 = vadd.f32 0.0, %v2419
    %v2421 = vpop.f32.mrb[0].mxu0
    %2422 = vmatprep.mubr.f32.mxu0 0.0
    %2423 = vmatmul.mubr.f32.gmra.mrb[0].mxu0 %v2351
    %v2424 = vpop.f32.mrb[0].mxu0
    %v2425 = vadd.f32 0.0, %v2424
    %v2426 = vpop.f32.mrb[0].mxu0
    %2427 = vdwg.mxu0
    %v2429 = vsel %vm648, %v1813, 0
    %v2432 = vsel %vm648, %v1818, 0
    %2434 = vmatprep.subr.mxu0 0.0
    %2435 = vmatpush1.msra.mxu0 %v2175
    %2436 = vmatprep.subr.mxu0 0.0
    %2437 = vmatpush1.msra.mxu0 %v2176
    %2438 = vmatprep.subr.mxu0 0.0
    %2439 = vmatpush1.msra.mxu0 0.0
    %2440 = vmatprep.subr.mxu0 0.0
    %2441 = vmatpush1.msra.mxu0 0.0
    %2442 = vmatprep.subr.mxu0 0.0
    %2443 = vmatpush1.msra.mxu0 0.0
    %2444 = vmatprep.subr.mxu0 0.0
    %2445 = vmatpush1.msra.mxu0 0.0
    %2446 = vmatprep.subr.mxu0 0.0
    %2447 = vmatpush1.msra.mxu0 0.0
    %2448 = vmatprep.subr.mxu0 0.0
    %2449 = vmatpush1.msra.mxu0 0.0
    %2450 = vmatprep.subr.mxu0 0.0
    %2451 = vmatpush1.msra.mxu0 0.0
    %2452 = vmatprep.subr.mxu0 0.0
    %2453 = vmatpush1.msra.mxu0 0.0
    %2454 = vmatprep.subr.mxu0 0.0
    %2455 = vmatpush1.msra.mxu0 0.0
    %2456 = vmatprep.subr.mxu0 0.0
    %2457 = vmatpush1.msra.mxu0 0.0
    %2458 = vmatprep.subr.mxu0 0.0
    %2459 = vmatpush1.msra.mxu0 0.0
    %2460 = vmatprep.subr.mxu0 0.0
    %2461 = vmatpush1.msra.mxu0 0.0
    %2462 = vmatprep.subr.mxu0 0.0
    %2463 = vmatpush1.msra.mxu0 0.0
    %2464 = vmatprep.subr.mxu0 0.0
    %2465 = vmatpush1.msra.mxu0 0.0
    %2466 = vmatprep.subr.mxu0 0.0
    %2467 = vmatpush1.msra.mxu0 0.0
    %2468 = vmatprep.subr.mxu0 0.0
    %2469 = vmatpush1.msra.mxu0 0.0
    %2470 = vmatprep.subr.mxu0 0.0
    %2471 = vmatpush1.msra.mxu0 0.0
    %2472 = vmatprep.subr.mxu0 0.0
    %2473 = vmatpush1.msra.mxu0 0.0
    %2474 = vmatprep.subr.mxu0 0.0
    %2475 = vmatpush1.msra.mxu0 0.0
    %2476 = vmatprep.subr.mxu0 0.0
    %2477 = vmatpush1.msra.mxu0 0.0
    %2478 = vmatprep.subr.mxu0 0.0
    %2479 = vmatpush1.msra.mxu0 0.0
    %2480 = vmatprep.subr.mxu0 0.0
    %2481 = vmatpush1.msra.mxu0 0.0
    %2482 = vmatprep.subr.mxu0 0.0
    %2483 = vmatpush1.msra.mxu0 0.0
    %2484 = vmatprep.subr.mxu0 0.0
    %2485 = vmatpush1.msra.mxu0 0.0
    %2486 = vmatprep.subr.mxu0 0.0
    %2487 = vmatpush1.msra.mxu0 0.0
    %2488 = vmatprep.subr.mxu0 0.0
    %2489 = vmatpush1.msra.mxu0 0.0
    %2490 = vmatprep.subr.mxu0 0.0
    %2491 = vmatpush1.msra.mxu0 0.0
    %2492 = vmatprep.subr.mxu0 0.0
    %2493 = vmatpush1.msra.mxu0 0.0
    %2494 = vmatprep.subr.mxu0 0.0
    %2495 = vmatpush1.msra.mxu0 0.0
    %2496 = vmatprep.subr.mxu0 0.0
    %2497 = vmatpush1.msra.mxu0 0.0
    %2498 = vmatprep.mubr.f32.mxu0 0.0
    %2499 = vmatmul.mubr.f32.gmra.mrb[0].mxu0 %v2429
    %v2500 = vpop.f32.mrb[0].mxu0
    %v2501 = vadd.f32 0.0, %v2500
    %v2502 = vpop.f32.mrb[0].mxu0
    %2503 = vmatprep.mubr.f32.mxu0 0.0
    %2504 = vmatmul.mubr.f32.gmra.mrb[0].mxu0 %v2432
    %v2505 = vpop.f32.mrb[0].mxu0
    %v2506 = vadd.f32 0.0, %v2505
    %v2507 = vpop.f32.mrb[0].mxu0
    %2508 = vdwg.mxu0
    %v2510 = vsel %vm648, %v1900, 0
    %v2513 = vsel %vm648, %v1905, 0
    %2515 = vmatprep.subr.mxu0 0.0
    %2516 = vmatpush1.msra.mxu0 %v2177
    %2517 = vmatprep.subr.mxu0 0.0
    %2518 = vmatpush1.msra.mxu0 %v2178
    %2519 = vmatprep.subr.mxu0 0.0
    %2520 = vmatpush1.msra.mxu0 0.0
    %2521 = vmatprep.subr.mxu0 0.0
    %2522 = vmatpush1.msra.mxu0 0.0
    %2523 = vmatprep.subr.mxu0 0.0
    %2524 = vmatpush1.msra.mxu0 0.0
    %2525 = vmatprep.subr.mxu0 0.0
    %2526 = vmatpush1.msra.mxu0 0.0
    %2527 = vmatprep.subr.mxu0 0.0
    %2528 = vmatpush1.msra.mxu0 0.0
    %2529 = vmatprep.subr.mxu0 0.0
    %2530 = vmatpush1.msra.mxu0 0.0
    %2531 = vmatprep.subr.mxu0 0.0
    %2532 = vmatpush1.msra.mxu0 0.0
    %2533 = vmatprep.subr.mxu0 0.0
    %2534 = vmatpush1.msra.mxu0 0.0
    %2535 = vmatprep.subr.mxu0 0.0
    %2536 = vmatpush1.msra.mxu0 0.0
    %2537 = vmatprep.subr.mxu0 0.0
    %2538 = vmatpush1.msra.mxu0 0.0
    %2539 = vmatprep.subr.mxu0 0.0
    %2540 = vmatpush1.msra.mxu0 0.0
    %2541 = vmatprep.subr.mxu0 0.0
    %2542 = vmatpush1.msra.mxu0 0.0
    %2543 = vmatprep.subr.mxu0 0.0
    %2544 = vmatpush1.msra.mxu0 0.0
    %2545 = vmatprep.subr.mxu0 0.0
    %2546 = vmatpush1.msra.mxu0 0.0
    %2547 = vmatprep.subr.mxu0 0.0
    %2548 = vmatpush1.msra.mxu0 0.0
    %2549 = vmatprep.subr.mxu0 0.0
    %2550 = vmatpush1.msra.mxu0 0.0
    %2551 = vmatprep.subr.mxu0 0.0
    %2552 = vmatpush1.msra.mxu0 0.0
    %2553 = vmatprep.subr.mxu0 0.0
    %2554 = vmatpush1.msra.mxu0 0.0
    %2555 = vmatprep.subr.mxu0 0.0
    %2556 = vmatpush1.msra.mxu0 0.0
    %2557 = vmatprep.subr.mxu0 0.0
    %2558 = vmatpush1.msra.mxu0 0.0
    %2559 = vmatprep.subr.mxu0 0.0
    %2560 = vmatpush1.msra.mxu0 0.0
    %2561 = vmatprep.subr.mxu0 0.0
    %2562 = vmatpush1.msra.mxu0 0.0
    %2563 = vmatprep.subr.mxu0 0.0
    %2564 = vmatpush1.msra.mxu0 0.0
    %2565 = vmatprep.subr.mxu0 0.0
    %2566 = vmatpush1.msra.mxu0 0.0
    %2567 = vmatprep.subr.mxu0 0.0
    %2568 = vmatpush1.msra.mxu0 0.0
    %2569 = vmatprep.subr.mxu0 0.0
    %2570 = vmatpush1.msra.mxu0 0.0
    %2571 = vmatprep.subr.mxu0 0.0
    %2572 = vmatpush1.msra.mxu0 0.0
    %2573 = vmatprep.subr.mxu0 0.0
    %2574 = vmatpush1.msra.mxu0 0.0
    %2575 = vmatprep.subr.mxu0 0.0
    %2576 = vmatpush1.msra.mxu0 0.0
    %2577 = vmatprep.subr.mxu0 0.0
    %2578 = vmatpush1.msra.mxu0 0.0
    %2579 = vmatprep.mubr.f32.mxu0 0.0
    %2580 = vmatmul.mubr.f32.gmra.mrb[0].mxu0 %v2510
    %v2581 = vpop.f32.mrb[0].mxu0
    %v2582 = vadd.f32 0.0, %v2581
    %v2583 = vpop.f32.mrb[0].mxu0
    %2584 = vmatprep.mubr.f32.mxu0 0.0
    %2585 = vmatmul.mubr.f32.gmra.mrb[0].mxu0 %v2513
    %v2586 = vpop.f32.mrb[0].mxu0
    %v2587 = vadd.f32 0.0, %v2586
    %v2588 = vpop.f32.mrb[0].mxu0
    %2589 = vdwg.mxu0
    %v2591 = vsel %vm648, %v1987, 0
    %v2594 = vsel %vm648, %v1992, 0
    %2596 = vmatprep.subr.mxu0 0.0
    %2597 = vmatpush1.msra.mxu0 %v2179
    %2598 = vmatprep.subr.mxu0 0.0
    %2599 = vmatpush1.msra.mxu0 %v2180
    %2600 = vmatprep.subr.mxu0 0.0
    %2601 = vmatpush1.msra.mxu0 0.0
    %2602 = vmatprep.subr.mxu0 0.0
    %2603 = vmatpush1.msra.mxu0 0.0
    %2604 = vmatprep.subr.mxu0 0.0
    %2605 = vmatpush1.msra.mxu0 0.0
    %2606 = vmatprep.subr.mxu0 0.0
    %2607 = vmatpush1.msra.mxu0 0.0
    %2608 = vmatprep.subr.mxu0 0.0
    %2609 = vmatpush1.msra.mxu0 0.0
    %2610 = vmatprep.subr.mxu0 0.0
    %2611 = vmatpush1.msra.mxu0 0.0
    %2612 = vmatprep.subr.mxu0 0.0
    %2613 = vmatpush1.msra.mxu0 0.0
    %2614 = vmatprep.subr.mxu0 0.0
    %2615 = vmatpush1.msra.mxu0 0.0
    %2616 = vmatprep.subr.mxu0 0.0
    %2617 = vmatpush1.msra.mxu0 0.0
    %2618 = vmatprep.subr.mxu0 0.0
    %2619 = vmatpush1.msra.mxu0 0.0
    %2620 = vmatprep.subr.mxu0 0.0
    %2621 = vmatpush1.msra.mxu0 0.0
    %2622 = vmatprep.subr.mxu0 0.0
    %2623 = vmatpush1.msra.mxu0 0.0
    %2624 = vmatprep.subr.mxu0 0.0
    %2625 = vmatpush1.msra.mxu0 0.0
    %2626 = vmatprep.subr.mxu0 0.0
    %2627 = vmatpush1.msra.mxu0 0.0
    %2628 = vmatprep.subr.mxu0 0.0
    %2629 = vmatpush1.msra.mxu0 0.0
    %2630 = vmatprep.subr.mxu0 0.0
    %2631 = vmatpush1.msra.mxu0 0.0
    %2632 = vmatprep.subr.mxu0 0.0
    %2633 = vmatpush1.msra.mxu0 0.0
    %2634 = vmatprep.subr.mxu0 0.0
    %2635 = vmatpush1.msra.mxu0 0.0
    %2636 = vmatprep.subr.mxu0 0.0
    %2637 = vmatpush1.msra.mxu0 0.0
    %2638 = vmatprep.subr.mxu0 0.0
    %2639 = vmatpush1.msra.mxu0 0.0
    %2640 = vmatprep.subr.mxu0 0.0
    %2641 = vmatpush1.msra.mxu0 0.0
    %2642 = vmatprep.subr.mxu0 0.0
    %2643 = vmatpush1.msra.mxu0 0.0
    %2644 = vmatprep.subr.mxu0 0.0
    %2645 = vmatpush1.msra.mxu0 0.0
    %2646 = vmatprep.subr.mxu0 0.0
    %2647 = vmatpush1.msra.mxu0 0.0
    %2648 = vmatprep.subr.mxu0 0.0
    %2649 = vmatpush1.msra.mxu0 0.0
    %2650 = vmatprep.subr.mxu0 0.0
    %2651 = vmatpush1.msra.mxu0 0.0
    %2652 = vmatprep.subr.mxu0 0.0
    %2653 = vmatpush1.msra.mxu0 0.0
    %2654 = vmatprep.subr.mxu0 0.0
    %2655 = vmatpush1.msra.mxu0 0.0
    %2656 = vmatprep.subr.mxu0 0.0
    %2657 = vmatpush1.msra.mxu0 0.0
    %2658 = vmatprep.subr.mxu0 0.0
    %2659 = vmatpush1.msra.mxu0 0.0
    %2660 = vmatprep.mubr.f32.mxu0 0.0
    %2661 = vmatmul.mubr.f32.gmra.mrb[0].mxu0 %v2591
    %v2662 = vpop.f32.mrb[0].mxu0
    %v2663 = vadd.f32 0.0, %v2662
    %v2664 = vpop.f32.mrb[0].mxu0
    %2665 = vmatprep.mubr.f32.mxu0 0.0
    %2666 = vmatmul.mubr.f32.gmra.mrb[0].mxu0 %v2594
    %v2667 = vpop.f32.mrb[0].mxu0
    %v2668 = vadd.f32 0.0, %v2667
    %v2669 = vpop.f32.mrb[0].mxu0
    %2670 = vdwg.mxu0
    %v2672 = vsel %vm648, %v2074, 0
    %v2675 = vsel %vm648, %v2079, 0
    %2677 = vmatprep.subr.mxu0 0.0
    %2678 = vmatpush1.msra.mxu0 %v2181
    %2679 = vmatprep.subr.mxu0 0.0
    %2680 = vmatpush1.msra.mxu0 %v2182
    %2681 = vmatprep.subr.mxu0 0.0
    %2682 = vmatpush1.msra.mxu0 0.0
    %2683 = vmatprep.subr.mxu0 0.0
    %2684 = vmatpush1.msra.mxu0 0.0
    %2685 = vmatprep.subr.mxu0 0.0
    %2686 = vmatpush1.msra.mxu0 0.0
    %2687 = vmatprep.subr.mxu0 0.0
    %2688 = vmatpush1.msra.mxu0 0.0
    %2689 = vmatprep.subr.mxu0 0.0
    %2690 = vmatpush1.msra.mxu0 0.0
    %2691 = vmatprep.subr.mxu0 0.0
    %2692 = vmatpush1.msra.mxu0 0.0
    %2693 = vmatprep.subr.mxu0 0.0
    %2694 = vmatpush1.msra.mxu0 0.0
    %2695 = vmatprep.subr.mxu0 0.0
    %2696 = vmatpush1.msra.mxu0 0.0
    %2697 = vmatprep.subr.mxu0 0.0
    %2698 = vmatpush1.msra.mxu0 0.0
    %2699 = vmatprep.subr.mxu0 0.0
    %2700 = vmatpush1.msra.mxu0 0.0
    %2701 = vmatprep.subr.mxu0 0.0
    %2702 = vmatpush1.msra.mxu0 0.0
    %2703 = vmatprep.subr.mxu0 0.0
    %2704 = vmatpush1.msra.mxu0 0.0
    %2705 = vmatprep.subr.mxu0 0.0
    %2706 = vmatpush1.msra.mxu0 0.0
    %2707 = vmatprep.subr.mxu0 0.0
    %2708 = vmatpush1.msra.mxu0 0.0
    %2709 = vmatprep.subr.mxu0 0.0
    %2710 = vmatpush1.msra.mxu0 0.0
    %2711 = vmatprep.subr.mxu0 0.0
    %2712 = vmatpush1.msra.mxu0 0.0
    %2713 = vmatprep.subr.mxu0 0.0
    %2714 = vmatpush1.msra.mxu0 0.0
    %2715 = vmatprep.subr.mxu0 0.0
    %2716 = vmatpush1.msra.mxu0 0.0
    %2717 = vmatprep.subr.mxu0 0.0
    %2718 = vmatpush1.msra.mxu0 0.0
    %2719 = vmatprep.subr.mxu0 0.0
    %2720 = vmatpush1.msra.mxu0 0.0
    %2721 = vmatprep.subr.mxu0 0.0
    %2722 = vmatpush1.msra.mxu0 0.0
    %2723 = vmatprep.subr.mxu0 0.0
    %2724 = vmatpush1.msra.mxu0 0.0
    %2725 = vmatprep.subr.mxu0 0.0
    %2726 = vmatpush1.msra.mxu0 0.0
    %2727 = vmatprep.subr.mxu0 0.0
    %2728 = vmatpush1.msra.mxu0 0.0
    %2729 = vmatprep.subr.mxu0 0.0
    %2730 = vmatpush1.msra.mxu0 0.0
    %2731 = vmatprep.subr.mxu0 0.0
    %2732 = vmatpush1.msra.mxu0 0.0
    %2733 = vmatprep.subr.mxu0 0.0
    %2734 = vmatpush1.msra.mxu0 0.0
    %2735 = vmatprep.subr.mxu0 0.0
    %2736 = vmatpush1.msra.mxu0 0.0
    %2737 = vmatprep.subr.mxu0 0.0
    %2738 = vmatpush1.msra.mxu0 0.0
    %2739 = vmatprep.subr.mxu0 0.0
    %2740 = vmatpush1.msra.mxu0 0.0
    %2741 = vmatprep.mubr.f32.mxu0 0.0
    %2742 = vmatmul.mubr.f32.gmra.mrb[0].mxu0 %v2672
    %v2743 = vpop.f32.mrb[0].mxu0
    %v2744 = vadd.f32 0.0, %v2743
    %v2745 = vpop.f32.mrb[0].mxu0
    %2746 = vmatprep.mubr.f32.mxu0 0.0
    %2747 = vmatmul.mubr.f32.gmra.mrb[0].mxu0 %v2675
    %v2748 = vpop.f32.mrb[0].mxu0
    %v2749 = vadd.f32 0.0, %v2748
    %v2750 = vpop.f32.mrb[0].mxu0
    %2751 = vdwg.mxu0
    %v2753 = vsel %vm648, %v2161, 0
    %v2756 = vsel %vm648, %v2166, 0
    %2758 = vmatprep.subr.mxu0 0.0
    %2759 = vmatpush1.msra.mxu0 %v2183
    %2760 = vmatprep.subr.mxu0 0.0
    %2761 = vmatpush1.msra.mxu0 %v2184
    %2762 = vmatprep.subr.mxu0 0.0
    %2763 = vmatpush1.msra.mxu0 0.0
    %2764 = vmatprep.subr.mxu0 0.0
    %2765 = vmatpush1.msra.mxu0 0.0
    %2766 = vmatprep.subr.mxu0 0.0
    %2767 = vmatpush1.msra.mxu0 0.0
    %2768 = vmatprep.subr.mxu0 0.0
    %2769 = vmatpush1.msra.mxu0 0.0
    %2770 = vmatprep.subr.mxu0 0.0
    %2771 = vmatpush1.msra.mxu0 0.0
    %2772 = vmatprep.subr.mxu0 0.0
    %2773 = vmatpush1.msra.mxu0 0.0
    %2774 = vmatprep.subr.mxu0 0.0
    %2775 = vmatpush1.msra.mxu0 0.0
    %2776 = vmatprep.subr.mxu0 0.0
    %2777 = vmatpush1.msra.mxu0 0.0
    %2778 = vmatprep.subr.mxu0 0.0
    %2779 = vmatpush1.msra.mxu0 0.0
    %2780 = vmatprep.subr.mxu0 0.0
    %2781 = vmatpush1.msra.mxu0 0.0
    %2782 = vmatprep.subr.mxu0 0.0
    %2783 = vmatpush1.msra.mxu0 0.0
    %2784 = vmatprep.subr.mxu0 0.0
    %2785 = vmatpush1.msra.mxu0 0.0
    %2786 = vmatprep.subr.mxu0 0.0
    %2787 = vmatpush1.msra.mxu0 0.0
    %2788 = vmatprep.subr.mxu0 0.0
    %2789 = vmatpush1.msra.mxu0 0.0
    %2790 = vmatprep.subr.mxu0 0.0
    %2791 = vmatpush1.msra.mxu0 0.0
    %2792 = vmatprep.subr.mxu0 0.0
    %2793 = vmatpush1.msra.mxu0 0.0
    %2794 = vmatprep.subr.mxu0 0.0
    %2795 = vmatpush1.msra.mxu0 0.0
    %2796 = vmatprep.subr.mxu0 0.0
    %2797 = vmatpush1.msra.mxu0 0.0
    %2798 = vmatprep.subr.mxu0 0.0
    %2799 = vmatpush1.msra.mxu0 0.0
    %2800 = vmatprep.subr.mxu0 0.0
    %2801 = vmatpush1.msra.mxu0 0.0
    %2802 = vmatprep.subr.mxu0 0.0
    %2803 = vmatpush1.msra.mxu0 0.0
    %2804 = vmatprep.subr.mxu0 0.0
    %2805 = vmatpush1.msra.mxu0 0.0
    %2806 = vmatprep.subr.mxu0 0.0
    %2807 = vmatpush1.msra.mxu0 0.0
    %2808 = vmatprep.subr.mxu0 0.0
    %2809 = vmatpush1.msra.mxu0 0.0
    %2810 = vmatprep.subr.mxu0 0.0
    %2811 = vmatpush1.msra.mxu0 0.0
    %2812 = vmatprep.subr.mxu0 0.0
    %2813 = vmatpush1.msra.mxu0 0.0
    %2814 = vmatprep.subr.mxu0 0.0
    %2815 = vmatpush1.msra.mxu0 0.0
    %2816 = vmatprep.subr.mxu0 0.0
    %2817 = vmatpush1.msra.mxu0 0.0
    %2818 = vmatprep.subr.mxu0 0.0
    %2819 = vmatpush1.msra.mxu0 0.0
    %2820 = vmatprep.subr.mxu0 0.0
    %2821 = vmatpush1.msra.mxu0 0.0
    %2822 = vmatprep.mubr.f32.mxu0 0.0
    %2823 = vmatmul.mubr.f32.gmra.mrb[0].mxu0 %v2753
    %v2824 = vpop.f32.mrb[0].mxu0
    %v2825 = vadd.f32 0.0, %v2824
    %v2826 = vpop.f32.mrb[0].mxu0
    %2827 = vmatprep.mubr.f32.mxu0 0.0
    %2828 = vmatmul.mubr.f32.gmra.mrb[0].mxu0 %v2756
    %v2829 = vpop.f32.mrb[0].mxu0
    %v2830 = vadd.f32 0.0, %v2829
    %v2831 = vpop.f32.mrb[0].mxu0
    %2832 = vdwg.mxu0
    %v2833 = vsel %vm30, %v2258, 0.0
    %v2834 = vsel %vm30, %v2339, 0.0
    %v2835 = vadd.f32 %v2833, %v2834
    %v2836 = vsel %vm30, %v2420, 0.0
    %v2837 = vadd.f32 %v2835, %v2836
    %v2838 = vsel %vm30, %v2501, 0.0
    %v2839 = vadd.f32 %v2837, %v2838
    %v2840 = vsel %vm30, %v2582, 0.0
    %v2841 = vadd.f32 %v2839, %v2840
    %v2842 = vsel %vm30, %v2663, 0.0
    %v2843 = vadd.f32 %v2841, %v2842
    %v2844 = vsel %vm30, %v2744, 0.0
    %v2845 = vadd.f32 %v2843, %v2844
    %v2846 = vsel %vm30, %v2825, 0.0
    %v2847 = vadd.f32 %v2845, %v2846
    %v2848 = vsel %vm30, %v2263, 0.0
    %v2849 = vsel %vm30, %v2344, 0.0
    %v2850 = vadd.f32 %v2848, %v2849
    %v2851 = vsel %vm30, %v2425, 0.0
    %v2852 = vadd.f32 %v2850, %v2851
    %v2853 = vsel %vm30, %v2506, 0.0
    %v2854 = vadd.f32 %v2852, %v2853
    %v2855 = vsel %vm30, %v2587, 0.0
    %v2856 = vadd.f32 %v2854, %v2855
    %v2857 = vsel %vm30, %v2668, 0.0
    %v2858 = vadd.f32 %v2856, %v2857
    %v2859 = vsel %vm30, %v2749, 0.0
    %v2860 = vadd.f32 %v2858, %v2859
    %v2861 = vsel %vm30, %v2830, 0.0
    %v2862 = vadd.f32 %v2860, %v2861
    %v2863 = vadd.f32 %v18, %v2847
    %v2864 = vadd.f32 %v19, %v2862
    %v2865 = vld [vmem:[%s2 + $0x80] sm:$0xff]
    %v2866 = vld [vmem:[%s2 + $0x88] sm:$0xff]
    %v2867 = vld [vmem:[%s2 + $0x90] sm:$0xff]
    %v2868 = vld [vmem:[%s2 + $0x98] sm:$0xff]
    %v2869 = vld [vmem:[%s2 + $0xa0] sm:$0xff]
    %v2870 = vld [vmem:[%s2 + $0xa8] sm:$0xff]
    %v2871 = vld [vmem:[%s2 + $0xb0] sm:$0xff]
    %v2872 = vld [vmem:[%s2 + $0xb8] sm:$0xff]
    %v2873 = vld [vmem:[%s3] sm:$0x1]
    %v2874 = vld [vmem:[%s3 + $0x1] sm:$0x1]
    %v2875 = vlaneseq
    %v2876 = vshrl.u32 %v2875, 7
    %v2877 = vsub.s32 0, %v2876
    %v2878 = vrot.slane %v2873, %v2877
    %v2880 = vsel %vm30, %v2863, 0
    %v2883 = vsel %vm30, %v2864, 0
    %2885 = vmatprep.subr.mxu0 0.0
    %2886 = vmatpush1.msra.mxu0 %v2865
    %2887 = vmatprep.subr.mxu0 0.0
    %2888 = vmatpush1.msra.mxu0 %v2866
    %2889 = vmatprep.subr.mxu0 0.0
    %2890 = vmatpush1.msra.mxu0 %v2867
    %2891 = vmatprep.subr.mxu0 0.0
    %2892 = vmatpush1.msra.mxu0 %v2868
    %2893 = vmatprep.subr.mxu0 0.0
    %2894 = vmatpush1.msra.mxu0 0.0
    %2895 = vmatprep.subr.mxu0 0.0
    %2896 = vmatpush1.msra.mxu0 0.0
    %2897 = vmatprep.subr.mxu0 0.0
    %2898 = vmatpush1.msra.mxu0 0.0
    %2899 = vmatprep.subr.mxu0 0.0
    %2900 = vmatpush1.msra.mxu0 0.0
    %2901 = vmatprep.subr.mxu0 0.0
    %2902 = vmatpush1.msra.mxu0 0.0
    %2903 = vmatprep.subr.mxu0 0.0
    %2904 = vmatpush1.msra.mxu0 0.0
    %2905 = vmatprep.subr.mxu0 0.0
    %2906 = vmatpush1.msra.mxu0 0.0
    %2907 = vmatprep.subr.mxu0 0.0
    %2908 = vmatpush1.msra.mxu0 0.0
    %2909 = vmatprep.subr.mxu0 0.0
    %2910 = vmatpush1.msra.mxu0 0.0
    %2911 = vmatprep.subr.mxu0 0.0
    %2912 = vmatpush1.msra.mxu0 0.0
    %2913 = vmatprep.subr.mxu0 0.0
    %2914 = vmatpush1.msra.mxu0 0.0
    %2915 = vmatprep.subr.mxu0 0.0
    %2916 = vmatpush1.msra.mxu0 0.0
    %2917 = vmatprep.subr.mxu0 0.0
    %2918 = vmatpush1.msra.mxu0 0.0
    %2919 = vmatprep.subr.mxu0 0.0
    %2920 = vmatpush1.msra.mxu0 0.0
    %2921 = vmatprep.subr.mxu0 0.0
    %2922 = vmatpush1.msra.mxu0 0.0
    %2923 = vmatprep.subr.mxu0 0.0
    %2924 = vmatpush1.msra.mxu0 0.0
    %2925 = vmatprep.subr.mxu0 0.0
    %2926 = vmatpush1.msra.mxu0 0.0
    %2927 = vmatprep.subr.mxu0 0.0
    %2928 = vmatpush1.msra.mxu0 0.0
    %2929 = vmatprep.subr.mxu0 0.0
    %2930 = vmatpush1.msra.mxu0 0.0
    %2931 = vmatprep.subr.mxu0 0.0
    %2932 = vmatpush1.msra.mxu0 0.0
    %2933 = vmatprep.subr.mxu0 0.0
    %2934 = vmatpush1.msra.mxu0 0.0
    %2935 = vmatprep.subr.mxu0 0.0
    %2936 = vmatpush1.msra.mxu0 0.0
    %2937 = vmatprep.subr.mxu0 0.0
    %2938 = vmatpush1.msra.mxu0 0.0
    %2939 = vmatprep.subr.mxu0 0.0
    %2940 = vmatpush1.msra.mxu0 0.0
    %2941 = vmatprep.subr.mxu0 0.0
    %2942 = vmatpush1.msra.mxu0 0.0
    %2943 = vmatprep.subr.mxu0 0.0
    %2944 = vmatpush1.msra.mxu0 0.0
    %2945 = vmatprep.subr.mxu0 0.0
    %2946 = vmatpush1.msra.mxu0 0.0
    %2947 = vmatprep.subr.mxu0 0.0
    %2948 = vmatpush1.msra.mxu0 0.0
    %2949 = vmatprep.mubr.f32.mxu0 0.0
    %2950 = vmatmul.mubr.f32.gmra.mrb[0].mxu0 %v2880
    %v2951 = vpop.f32.mrb[0].mxu0
    %v2952 = vadd.f32 %v2878, %v2951
    %v2953 = vpop.f32.mrb[0].mxu0
    %2954 = vmatprep.mubr.f32.mxu0 0.0
    %2955 = vmatmul.mubr.f32.gmra.mrb[0].mxu0 %v2883
    %v2956 = vpop.f32.mrb[0].mxu0
    %v2957 = vadd.f32 %v2878, %v2956
    %v2958 = vpop.f32.mrb[0].mxu0
    %2959 = vdwg.mxu0
    %v2960 = vmax.f32 %v2952, 0.0
    %v2961 = vmax.f32 %v2957, 0.0
    %v2962 = vlaneseq
    %v2963 = vshrl.u32 %v2962, 7
    %v2964 = vsub.s32 0, %v2963
    %v2965 = vrot.slane %v2874, %v2964
    %v2967 = vsel %vm30, %v2960, 0
    %v2970 = vsel %vm30, %v2961, 0
    %2972 = vmatprep.subr.mxu0 0.0
    %2973 = vmatpush1.msra.mxu0 %v2869
    %2974 = vmatprep.subr.mxu0 0.0
    %2975 = vmatpush1.msra.mxu0 %v2870
    %2976 = vmatprep.subr.mxu0 0.0
    %2977 = vmatpush1.msra.mxu0 %v2871
    %2978 = vmatprep.subr.mxu0 0.0
    %2979 = vmatpush1.msra.mxu0 %v2872
    %2980 = vmatprep.subr.mxu0 0.0
    %2981 = vmatpush1.msra.mxu0 0.0
    %2982 = vmatprep.subr.mxu0 0.0
    %2983 = vmatpush1.msra.mxu0 0.0
    %2984 = vmatprep.subr.mxu0 0.0
    %2985 = vmatpush1.msra.mxu0 0.0
    %2986 = vmatprep.subr.mxu0 0.0
    %2987 = vmatpush1.msra.mxu0 0.0
    %2988 = vmatprep.subr.mxu0 0.0
    %2989 = vmatpush1.msra.mxu0 0.0
    %2990 = vmatprep.subr.mxu0 0.0
    %2991 = vmatpush1.msra.mxu0 0.0
    %2992 = vmatprep.subr.mxu0 0.0
    %2993 = vmatpush1.msra.mxu0 0.0
    %2994 = vmatprep.subr.mxu0 0.0
    %2995 = vmatpush1.msra.mxu0 0.0
    %2996 = vmatprep.subr.mxu0 0.0
    %2997 = vmatpush1.msra.mxu0 0.0
    %2998 = vmatprep.subr.mxu0 0.0
    %2999 = vmatpush1.msra.mxu0 0.0
    %3000 = vmatprep.subr.mxu0 0.0
    %3001 = vmatpush1.msra.mxu0 0.0
    %3002 = vmatprep.subr.mxu0 0.0
    %3003 = vmatpush1.msra.mxu0 0.0
    %3004 = vmatprep.subr.mxu0 0.0
    %3005 = vmatpush1.msra.mxu0 0.0
    %3006 = vmatprep.subr.mxu0 0.0
    %3007 = vmatpush1.msra.mxu0 0.0
    %3008 = vmatprep.subr.mxu0 0.0
    %3009 = vmatpush1.msra.mxu0 0.0
    %3010 = vmatprep.subr.mxu0 0.0
    %3011 = vmatpush1.msra.mxu0 0.0
    %3012 = vmatprep.subr.mxu0 0.0
    %3013 = vmatpush1.msra.mxu0 0.0
    %3014 = vmatprep.subr.mxu0 0.0
    %3015 = vmatpush1.msra.mxu0 0.0
    %3016 = vmatprep.subr.mxu0 0.0
    %3017 = vmatpush1.msra.mxu0 0.0
    %3018 = vmatprep.subr.mxu0 0.0
    %3019 = vmatpush1.msra.mxu0 0.0
    %3020 = vmatprep.subr.mxu0 0.0
    %3021 = vmatpush1.msra.mxu0 0.0
    %3022 = vmatprep.subr.mxu0 0.0
    %3023 = vmatpush1.msra.mxu0 0.0
    %3024 = vmatprep.subr.mxu0 0.0
    %3025 = vmatpush1.msra.mxu0 0.0
    %3026 = vmatprep.subr.mxu0 0.0
    %3027 = vmatpush1.msra.mxu0 0.0
    %3028 = vmatprep.subr.mxu0 0.0
    %3029 = vmatpush1.msra.mxu0 0.0
    %3030 = vmatprep.subr.mxu0 0.0
    %3031 = vmatpush1.msra.mxu0 0.0
    %3032 = vmatprep.subr.mxu0 0.0
    %3033 = vmatpush1.msra.mxu0 0.0
    %3034 = vmatprep.subr.mxu0 0.0
    %3035 = vmatpush1.msra.mxu0 0.0
    %3036 = vmatprep.mubr.f32.mxu0 0.0
    %3037 = vmatmul.mubr.f32.gmra.mrb[0].mxu0 %v2967
    %v3038 = vpop.f32.mrb[0].mxu0
    %v3039 = vadd.f32 %v2965, %v3038
    %v3040 = vpop.f32.mrb[0].mxu0
    %3041 = vmatprep.mubr.f32.mxu0 0.0
    %3042 = vmatmul.mubr.f32.gmra.mrb[0].mxu0 %v2970
    %v3043 = vpop.f32.mrb[0].mxu0
    %v3044 = vadd.f32 %v2965, %v3043
    %v3045 = vpop.f32.mrb[0].mxu0
    %3046 = vdwg.mxu0
    %v3047 = vadd.f32 %v3039, %v2863
    %v3048 = vadd.f32 %v3044, %v2864
    %3049 = vst.msk [vmem:[#allocation2] sm:$0xff] %vm30, %v3047
    %3050 = vst.msk [vmem:[#allocation2 + $0x8] sm:$0xff] %vm30, %v3048
    // Predicated region
    $region18: #{transformer_block.1} parent=1 // pred_check
      _
    $region19: #{transformer_block.1} parent=1 // pred_check_branch
      %3052 = sbr.rel (0) target = $region21
    $region20: #{transformer_block.1} parent=1 // pred_region
      %s3054 = ssub.s32 256, 256
      %3055 = vsyncadd [#allocation3], %s3054
      %s3056 = sshll.u32 [#allocation2], 4
      %s3057 = int_to_ptr.vmem [resolvable:$true] %s3056
      %3062 = dma.vmem_to_hbm [thread:$0]  %s3057, 256, %s4, [#allocation3], 128, 128, 8
    $region21: #{transformer_block.1} parent=1 // pred_fallthru
      _
    // Predicated region
    $region22: #{transformer_block.1} parent=1 // pred_check
      _
    $region23: #{transformer_block.1} parent=1 // pred_check_branch
      %3064 = sbr.rel (0) target = $region25
    $region24: #{transformer_block.1} parent=1 // pred_region
      %3065 = dma.done [#allocation3], 256
    $region25: #{transformer_block.1} parent=1 // pred_fallthru
      _
    %3066 = vsyncpa [#allocation3], 1

</llo_original>
